<compile_context>
chip_gen: v5e
topology: v5e:2x2
jax: 0.10.0
libtpu: 0.0.40
codegen_flags: <defaults>
</compile_context>

<pallas_src>
import jax
import jax.numpy as jnp
from jax import lax
from jax.experimental import pallas as pl
from jax.experimental.pallas import tpu as pltpu


# ----------------------------------------------------------------------------
# Fused Pallas kernel: 4x GloRe (shared weights) + concat + 1x1 "out" conv
# ----------------------------------------------------------------------------
def _pyramid_fused_kernel(x_ref, tw_ref, tb_ref, pw_ref, pb_ref,
                          w1_ref, b1_ref, w2_ref, b2_ref,
                          iw_ref, ib_ref, ow_ref, ob_ref, o_ref):
    # x_ref block: (1, C, 4*S).  The four branch feature maps of one batch
    # element are concatenated along the lane (spatial) axis:
    #   [:, 0:S]    full-resolution x        (-> gnn(x))
    #   [:, S:2S]   upsampled pool=2 branch  (-> feat2)
    #   [:, 2S:3S]  upsampled pool=4 branch  (-> feat3)
    #   [:, 3S:4S]  upsampled pool=8 branch  (-> feat4)
    # All (tiny) weights are whole-array VMEM residents (constant index_map),
    # so they are fetched once for the whole grid.
    x_all = x_ref[0]                                   # (C, 4S), compute dtype
    C, S4 = x_all.shape
    S = S4 // 4
    cdt = x_all.dtype                                  # bf16 or f32 MXU inputs
    Cout = ow_ref.shape[0]

    # theta / phi 1x1 convs as ONE wide matmul over all four branches.
    Bm_all = jnp.dot(tw_ref[...], x_all,
                     preferred_element_type=jnp.float32) + tb_ref[...]   # (N, 4S) f32
    xr_all = jnp.dot(pw_ref[...], x_all,
                     preferred_element_type=jnp.float32) + pb_ref[...]   # (mid, 4S) f32

    w_out = ow_ref[...]                                # (Cout, 4C)
    acc = jnp.zeros((Cout, S), jnp.float32)
    for g in range(4):                                 # unrolled shared-weight GloRe passes
        sl = slice(g * S, (g + 1) * S)                 # static, lane-aligned (S % 128 == 0)
        Bm = Bm_all[:, sl]                             # (N, S)
        xr = xr_all[:, sl]                             # (mid, S)
        # v = B @ x_reduced^T : contract over S without an explicit transpose
        v = lax.dot_general(Bm, xr, (((1,), (1,)), ((), ())),
                            preferred_element_type=jnp.float32)          # (N, mid)
        # GCN conv1d_1 over the N "node" channels
        h = jnp.dot(w1_ref[...], v,
                    preferred_element_type=jnp.float32) + b1_ref[...]    # (N, mid)
        # GCN conv1d_2 over the mid channels: contract h on its mid axis (no h.T)
        z_md = lax.dot_general(w2_ref[...], h, (((1,), (1,)), ((), ())),
                               preferred_element_type=jnp.float32) + b2_ref[...]  # (mid, N)
        # y = (B^T z)^T = z_md @ B
        y = jnp.dot(z_md, Bm, preferred_element_type=jnp.float32)        # (mid, S)
        # phi_inv 1x1 conv + residual (bias/residual elementwise math in f32)
        xres = jnp.dot(iw_ref[...], y.astype(cdt),
                       preferred_element_type=jnp.float32) + ib_ref[...]  # (C, S)
        feat = x_all[:, sl].astype(jnp.float32) + xres                    # (C, S)
        # fused concat + 1x1 "out" conv: split the weight per branch, accumulate
        acc = acc + jnp.dot(w_out[:, g * C:(g + 1) * C], feat.astype(cdt),
                            preferred_element_type=jnp.float32)
    o_ref[0] = (acc + ob_ref[...]).astype(o_ref.dtype)


# ----------------------------------------------------------------------------
# Pallas wrapper
# ----------------------------------------------------------------------------
def pyramid_fused_pallas(feats_stacked, params, compute_dtype, out_dtype):
    """feats_stacked: (B, C, 4*S) with the four branches along the lane axis."""
    B, C, S4 = feats_stacked.shape
    S = S4 // 4
    N = params["theta_w"].shape[0]
    Cout = params["out_w"].shape[0]
    cdt, f32 = compute_dtype, jnp.float32

    args = [
        feats_stacked,
        params["theta_w"].astype(cdt),   params["theta_b"].reshape(N, 1).astype(f32),
        params["phi_w"].astype(cdt),     params["phi_b"].reshape(C, 1).astype(f32),
        params["gcn_w1"].astype(f32),    params["gcn_b1"].reshape(N, 1).astype(f32),
        params["gcn_w2"].astype(f32),    params["gcn_b2"].reshape(C, 1).astype(f32),
        params["phi_inv_w"].astype(cdt), params["phi_inv_b"].reshape(C, 1).astype(f32),
        params["out_w"].astype(cdt),     params["out_b"].reshape(Cout, 1).astype(f32),
    ]
    in_specs = [pl.BlockSpec((1, C, S4), lambda b: (b, 0, 0))] + \
               [pl.BlockSpec(a.shape, lambda b: (0, 0)) for a in args[1:]]

    # Explicit VMEM budget: double-buffered input + output blocks + resident
    # weights, with headroom; clamped to v7x's 64 MiB physical VMEM.
    weight_bytes = sum(int(a.size) * a.dtype.itemsize for a in args[1:])
    block_bytes = 2 * C * S4 * feats_stacked.dtype.itemsize + 2 * Cout * S * 4
    vmem_limit = int(min(max(3 * (block_bytes + weight_bytes), 16 << 20), 64 << 20))

    return pl.pallas_call(
        _pyramid_fused_kernel,
        out_shape=jax.ShapeDtypeStruct((B, Cout, S), out_dtype),
        grid=(B,),
        in_specs=in_specs,
        out_specs=pl.BlockSpec((1, Cout, S), lambda b: (b, 0, 0)),
        compiler_params=pltpu.CompilerParams(
            dimension_semantics=("parallel",),   # megacore / 2nd TC on v7x
            vmem_limit_bytes=vmem_limit),
    )(*args)


# ----------------------------------------------------------------------------
# Plain-JAX glue (tiny pooled maps only)
# ----------------------------------------------------------------------------
def adaptive_avg_pool(x, k):
    B, C, H, W = x.shape
    assert H % k == 0 and W % k == 0  # exact adaptive pooling (H, W divisible)
    return x.reshape(B, C, k, H // k, k, W // k).mean(axis=(3, 5))


def conv1x1_jax(x, w, b):
    return jnp.einsum("oc,bchw->bohw", w, x) + b[None, :, None, None]


def batchnorm_train(x, gamma, beta, eps=1e-5):
    # nn.BatchNorm2d in (default) training mode: batch statistics, biased var.
    mean = x.mean(axis=(0, 2, 3), keepdims=True)
    var = x.var(axis=(0, 2, 3), keepdims=True)
    return gamma[None, :, None, None] * (x - mean) * lax.rsqrt(var + eps) + beta[None, :, None, None]


def _interp_matrix(out_size, in_size):
    # F.interpolate(mode='bilinear', align_corners=True), separable 1-D matrix.
    if in_size == 1:
        return jnp.ones((out_size, 1), jnp.float32)
    src = jnp.arange(out_size, dtype=jnp.float32) * (in_size - 1) / (out_size - 1)
    src = jnp.clip(src, 0.0, in_size - 1)
    i0 = jnp.clip(jnp.floor(src).astype(jnp.int32), 0, in_size - 2)
    frac = src - i0.astype(jnp.float32)
    M = jnp.zeros((out_size, in_size), jnp.float32)
    rows = jnp.arange(out_size)
    M = M.at[rows, i0].add(1.0 - frac)
    M = M.at[rows, i0 + 1].add(frac)
    return M


def bilinear_upsample(x, size):
    H, W = size
    Mh = _interp_matrix(H, x.shape[2])
    Mw = _interp_matrix(W, x.shape[3])
    return jnp.einsum("Hh,bchw,Ww->bcHW", Mh, x, Mw)


def _branch_pre(x, params, pool_size):
    H, W = x.shape[2], x.shape[3]
    p = adaptive_avg_pool(x, pool_size)
    c = conv1x1_jax(p, params["conv1_w"], params["conv1_b"])
    r = jnp.maximum(batchnorm_train(c, params["bn_w"], params["bn_b"]), 0.0)
    return bilinear_upsample(r, (H, W))


# ----------------------------------------------------------------------------
# Full forward (Pallas) and pure-JAX reference
# ----------------------------------------------------------------------------
def pyramid_pooling_forward(x, params, compute_dtype=jnp.bfloat16):
    B, C, H, W = x.shape
    S = H * W
    Cout = params["out_w"].shape[0]
    branches = [x.reshape(B, C, S)]
    for k in (2, 4, 8):
        branches.append(_branch_pre(x, params, k).reshape(B, C, S))
    # (B, C, 4, S) -> (B, C, 4*S): four branches side by side on the lane axis.
    stacked = jnp.stack(branches, axis=2).reshape(B, C, 4 * S).astype(compute_dtype)
    out = pyramid_fused_pallas(stacked, params, compute_dtype, x.dtype)
    return out.reshape(B, Cout, H, W)


def _glore_ref(xf, p):
    Bm = jnp.einsum("nc,bcs->bns", p["theta_w"], xf) + p["theta_b"][None, :, None]
    xr = jnp.einsum("mc,bcs->bms", p["phi_w"], xf) + p["phi_b"][None, :, None]
    v = jnp.einsum("bns,bms->bnm", Bm, xr)
    h = jnp.einsum("on,bnm->bom", p["gcn_w1"], v) + p["gcn_b1"][None, :, None]
    z = jnp.einsum("pm,bnm->bnp", p["gcn_w2"], h) + p["gcn_b2"][None, None, :]
    y = jnp.einsum("bnp,bns->bps", z, Bm)
    xres = jnp.einsum("cp,bps->bcs", p["phi_inv_w"], y) + p["phi_inv_b"][None, :, None]
    return xf + xres


def pyramid_pooling_ref(x, params):
    B, C, H, W = x.shape
    S = H * W
    Cout = params["out_w"].shape[0]
    feats = [_glore_ref(x.reshape(B, C, S), params)]
    for k in (2, 4, 8):
        up = _branch_pre(x, params, k).reshape(B, C, S)
        feats.append(_glore_ref(up, params))
    cat = jnp.concatenate(feats, axis=1)                     # (B, 4C, S)
    out = jnp.einsum("oc,bcs->bos", params["out_w"], cat) + params["out_b"][None, :, None]
    return out.reshape(B, Cout, H, W)


# ----------------------------------------------------------------------------
# Deterministic synthetic parameters (shapes follow the PyTorch __init__)
# ----------------------------------------------------------------------------
def init_params(key, in_channels, out_channels, N):
    C = in_channels
    ks = jax.random.split(key, 16)
    w = lambda k, shape, s=0.2: s * jax.random.normal(k, shape, dtype=jnp.float32)
    return dict(
        conv1_w=w(ks[0], (C, C)), conv1_b=w(ks[1], (C,)),
        bn_w=jnp.ones((C,), jnp.float32), bn_b=jnp.zeros((C,), jnp.float32),
        theta_w=w(ks[2], (N, C)), theta_b=w(ks[3], (N,)),
        phi_w=w(ks[4], (C, C)), phi_b=w(ks[5], (C,)),
        gcn_w1=w(ks[6], (N, N)), gcn_b1=w(ks[7], (N,)),
        gcn_w2=w(ks[8], (C, C)), gcn_b2=w(ks[9], (C,)),
        phi_inv_w=w(ks[10], (C, C)), phi_inv_b=w(ks[11], (C,)),
        out_w=w(ks[12], (out_channels, 4 * C)), out_b=w(ks[13], (out_channels,)),
    )
    # TODO(synk): conv2/conv3/conv4 from __init__ are unused in forward; omitted.


if __name__ == "__main__":
    key = jax.random.PRNGKey(0)
    x = jax.random.normal(key, (2, 4, 16, 16), dtype=jnp.float32)
    params = init_params(jax.random.PRNGKey(1), in_channels=4, out_channels=4, N=5)

    ref = pyramid_pooling_ref(x, params)

    # Strict check: f32 compute path is bit-faithful to the module math.
    out_f32 = jax.block_until_ready(
        pyramid_pooling_forward(x, params, compute_dtype=jnp.float32))
    assert out_f32.shape == (2, 4, 16, 16), out_f32.shape
    err_f32 = float(jnp.max(jnp.abs(out_f32 - ref)))
    assert err_f32 < 1e-4, err_f32

    # Sanity check: bf16 MXU-input path (default, production config).
    out_bf16 = jax.block_until_ready(
        pyramid_pooling_forward(x, params, compute_dtype=jnp.bfloat16))
    assert out_bf16.shape == (2, 4, 16, 16), out_bf16.shape
    tol = 0.1 + 0.1 * jnp.abs(ref)
    assert bool(jnp.all(jnp.abs(out_bf16 - ref) <= tol)), \
        float(jnp.max(jnp.abs(out_bf16 - ref)))

    print("KERNEL_OK")
</pallas_src>

<mosaic_0001>
module attributes {stable_mosaic.version = 11 : i64} {
  func.func @_pyramid_fused_kernel(%arg0: i32, %arg1: memref<1x4x1024xf32, #tpu.memory_space<vmem>>, %arg2: memref<5x4xf32, #tpu.memory_space<vmem>>, %arg3: memref<5x1xf32, #tpu.memory_space<vmem>>, %arg4: memref<4x4xf32, #tpu.memory_space<vmem>>, %arg5: memref<4x1xf32, #tpu.memory_space<vmem>>, %arg6: memref<5x5xf32, #tpu.memory_space<vmem>>, %arg7: memref<5x1xf32, #tpu.memory_space<vmem>>, %arg8: memref<4x4xf32, #tpu.memory_space<vmem>>, %arg9: memref<4x1xf32, #tpu.memory_space<vmem>>, %arg10: memref<4x4xf32, #tpu.memory_space<vmem>>, %arg11: memref<4x1xf32, #tpu.memory_space<vmem>>, %arg12: memref<4x16xf32, #tpu.memory_space<vmem>>, %arg13: memref<4x1xf32, #tpu.memory_space<vmem>>, %arg14: memref<1x4x256xf32, #tpu.memory_space<vmem>>) attributes {dimension_semantics = [#tpu.dimension_semantics<parallel>], iteration_bounds = array<i64: 2>, scalar_prefetch = 0 : i64, scratch_operands = 0 : i64, tpu.core_type = #tpu.core_type<tc>, window_params = [{transform_indices = @transform_0, window_bounds = array<i64: 1, 4, 1024>}, {pipeline_mode = #tpu.pipeline_mode<synchronous>, transform_indices = @transform_1, window_bounds = array<i64: 5, 4>}, {pipeline_mode = #tpu.pipeline_mode<synchronous>, transform_indices = @transform_2, window_bounds = array<i64: 5, 1>}, {pipeline_mode = #tpu.pipeline_mode<synchronous>, transform_indices = @transform_3, window_bounds = array<i64: 4, 4>}, {pipeline_mode = #tpu.pipeline_mode<synchronous>, transform_indices = @transform_4, window_bounds = array<i64: 4, 1>}, {pipeline_mode = #tpu.pipeline_mode<synchronous>, transform_indices = @transform_5, window_bounds = array<i64: 5, 5>}, {pipeline_mode = #tpu.pipeline_mode<synchronous>, transform_indices = @transform_6, window_bounds = array<i64: 5, 1>}, {pipeline_mode = #tpu.pipeline_mode<synchronous>, transform_indices = @transform_7, window_bounds = array<i64: 4, 4>}, {pipeline_mode = #tpu.pipeline_mode<synchronous>, transform_indices = @transform_8, window_bounds = array<i64: 4, 1>}, {pipeline_mode = #tpu.pipeline_mode<synchronous>, transform_indices = @transform_9, window_bounds = array<i64: 4, 4>}, {pipeline_mode = #tpu.pipeline_mode<synchronous>, transform_indices = @transform_10, window_bounds = array<i64: 4, 1>}, {pipeline_mode = #tpu.pipeline_mode<synchronous>, transform_indices = @transform_11, window_bounds = array<i64: 4, 16>}, {pipeline_mode = #tpu.pipeline_mode<synchronous>, transform_indices = @transform_12, window_bounds = array<i64: 4, 1>}, {transform_indices = @transform_13, window_bounds = array<i64: 1, 4, 256>}]} {
    %c0 = arith.constant 0 : index
    %c0_0 = arith.constant 0 : index
    %c0_1 = arith.constant 0 : index
    %0 = vector.load %arg1[%c0, %c0_0, %c0_1] : memref<1x4x1024xf32, #tpu.memory_space<vmem>>, vector<1x4x1024xf32>
    %1 = vector.shape_cast %0 : vector<1x4x1024xf32> to vector<4x1024xf32>
    %c0_2 = arith.constant 0 : index
    %c0_3 = arith.constant 0 : index
    %2 = vector.load %arg2[%c0_2, %c0_3] : memref<5x4xf32, #tpu.memory_space<vmem>>, vector<5x4xf32>
    %cst = arith.constant dense<0.000000e+00> : vector<5x1024xf32>
    %3 = tpu.matmul %2, %1, %cst {dimension_numbers = #tpu.dot_dimension_numbers<[1], [0], [0], [1], [0, 0, 1, 1], [], []>} : vector<5x4xf32>, vector<4x1024xf32>, vector<5x1024xf32> -> vector<5x1024xf32>
    %c0_4 = arith.constant 0 : index
    %c0_5 = arith.constant 0 : index
    %4 = vector.load %arg3[%c0_4, %c0_5] : memref<5x1xf32, #tpu.memory_space<vmem>>, vector<5x1xf32>
    %5 = vector.broadcast %4 : vector<5x1xf32> to vector<5x1024xf32>
    %6 = arith.addf %3, %5 : vector<5x1024xf32>
    %c0_6 = arith.constant 0 : index
    %c0_7 = arith.constant 0 : index
    %7 = vector.load %arg4[%c0_6, %c0_7] : memref<4x4xf32, #tpu.memory_space<vmem>>, vector<4x4xf32>
    %cst_8 = arith.constant dense<0.000000e+00> : vector<4x1024xf32>
    %8 = tpu.matmul %7, %1, %cst_8 {dimension_numbers = #tpu.dot_dimension_numbers<[1], [0], [0], [1], [0, 0, 1, 1], [], []>} : vector<4x4xf32>, vector<4x1024xf32>, vector<4x1024xf32> -> vector<4x1024xf32>
    %c0_9 = arith.constant 0 : index
    %c0_10 = arith.constant 0 : index
    %9 = vector.load %arg5[%c0_9, %c0_10] : memref<4x1xf32, #tpu.memory_space<vmem>>, vector<4x1xf32>
    %10 = vector.broadcast %9 : vector<4x1xf32> to vector<4x1024xf32>
    %11 = arith.addf %8, %10 : vector<4x1024xf32>
    %c0_11 = arith.constant 0 : index
    %c0_12 = arith.constant 0 : index
    %12 = vector.load %arg12[%c0_11, %c0_12] : memref<4x16xf32, #tpu.memory_space<vmem>>, vector<4x16xf32>
    %cst_13 = arith.constant 0.000000e+00 : f32
    %13 = vector.broadcast %cst_13 : f32 to vector<4x256xf32>
    %14 = vector.extract_strided_slice %6 {offsets = [0, 0], sizes = [5, 256], strides = [1, 1]} : vector<5x1024xf32> to vector<5x256xf32>
    %15 = vector.extract_strided_slice %11 {offsets = [0, 0], sizes = [4, 256], strides = [1, 1]} : vector<4x1024xf32> to vector<4x256xf32>
    %cst_14 = arith.constant dense<0.000000e+00> : vector<5x4xf32>
    %16 = tpu.matmul %14, %15, %cst_14 {dimension_numbers = #tpu.dot_dimension_numbers<[1], [1], [0], [0], [0, 0, 1, 0], [], []>} : vector<5x256xf32>, vector<4x256xf32>, vector<5x4xf32> -> vector<5x4xf32>
    %c0_15 = arith.constant 0 : index
    %c0_16 = arith.constant 0 : index
    %17 = vector.load %arg6[%c0_15, %c0_16] : memref<5x5xf32, #tpu.memory_space<vmem>>, vector<5x5xf32>
    %cst_17 = arith.constant dense<0.000000e+00> : vector<5x4xf32>
    %18 = tpu.matmul %17, %16, %cst_17 {dimension_numbers = #tpu.dot_dimension_numbers<[1], [0], [0], [1], [0, 0, 1, 1], [], []>} : vector<5x5xf32>, vector<5x4xf32>, vector<5x4xf32> -> vector<5x4xf32>
    %c0_18 = arith.constant 0 : index
    %c0_19 = arith.constant 0 : index
    %19 = vector.load %arg7[%c0_18, %c0_19] : memref<5x1xf32, #tpu.memory_space<vmem>>, vector<5x1xf32>
    %20 = vector.broadcast %19 : vector<5x1xf32> to vector<5x4xf32>
    %21 = arith.addf %18, %20 : vector<5x4xf32>
    %c0_20 = arith.constant 0 : index
    %c0_21 = arith.constant 0 : index
    %22 = vector.load %arg8[%c0_20, %c0_21] : memref<4x4xf32, #tpu.memory_space<vmem>>, vector<4x4xf32>
    %cst_22 = arith.constant dense<0.000000e+00> : vector<4x5xf32>
    %23 = tpu.matmul %22, %21, %cst_22 {dimension_numbers = #tpu.dot_dimension_numbers<[1], [1], [0], [0], [0, 0, 1, 0], [], []>} : vector<4x4xf32>, vector<5x4xf32>, vector<4x5xf32> -> vector<4x5xf32>
    %c0_23 = arith.constant 0 : index
    %c0_24 = arith.constant 0 : index
    %24 = vector.load %arg9[%c0_23, %c0_24] : memref<4x1xf32, #tpu.memory_space<vmem>>, vector<4x1xf32>
    %25 = vector.broadcast %24 : vector<4x1xf32> to vector<4x5xf32>
    %26 = arith.addf %23, %25 : vector<4x5xf32>
    %cst_25 = arith.constant dense<0.000000e+00> : vector<4x256xf32>
    %27 = tpu.matmul %26, %14, %cst_25 {dimension_numbers = #tpu.dot_dimension_numbers<[1], [0], [0], [1], [0, 0, 1, 1], [], []>} : vector<4x5xf32>, vector<5x256xf32>, vector<4x256xf32> -> vector<4x256xf32>
    %c0_26 = arith.constant 0 : index
    %c0_27 = arith.constant 0 : index
    %28 = vector.load %arg10[%c0_26, %c0_27] : memref<4x4xf32, #tpu.memory_space<vmem>>, vector<4x4xf32>
    %cst_28 = arith.constant dense<0.000000e+00> : vector<4x256xf32>
    %29 = tpu.matmul %28, %27, %cst_28 {dimension_numbers = #tpu.dot_dimension_numbers<[1], [0], [0], [1], [0, 0, 1, 1], [], []>} : vector<4x4xf32>, vector<4x256xf32>, vector<4x256xf32> -> vector<4x256xf32>
    %c0_29 = arith.constant 0 : index
    %c0_30 = arith.constant 0 : index
    %30 = vector.load %arg11[%c0_29, %c0_30] : memref<4x1xf32, #tpu.memory_space<vmem>>, vector<4x1xf32>
    %31 = vector.broadcast %30 : vector<4x1xf32> to vector<4x256xf32>
    %32 = arith.addf %29, %31 : vector<4x256xf32>
    %33 = vector.extract_strided_slice %1 {offsets = [0, 0], sizes = [4, 256], strides = [1, 1]} : vector<4x1024xf32> to vector<4x256xf32>
    %34 = arith.addf %33, %32 : vector<4x256xf32>
    %35 = vector.extract_strided_slice %12 {offsets = [0, 0], sizes = [4, 4], strides = [1, 1]} : vector<4x16xf32> to vector<4x4xf32>
    %cst_31 = arith.constant dense<0.000000e+00> : vector<4x256xf32>
    %36 = tpu.matmul %35, %34, %cst_31 {dimension_numbers = #tpu.dot_dimension_numbers<[1], [0], [0], [1], [0, 0, 1, 1], [], []>} : vector<4x4xf32>, vector<4x256xf32>, vector<4x256xf32> -> vector<4x256xf32>
    %37 = arith.addf %13, %36 : vector<4x256xf32>
    %38 = vector.extract_strided_slice %6 {offsets = [0, 256], sizes = [5, 256], strides = [1, 1]} : vector<5x1024xf32> to vector<5x256xf32>
    %39 = vector.extract_strided_slice %11 {offsets = [0, 256], sizes = [4, 256], strides = [1, 1]} : vector<4x1024xf32> to vector<4x256xf32>
    %cst_32 = arith.constant dense<0.000000e+00> : vector<5x4xf32>
    %40 = tpu.matmul %38, %39, %cst_32 {dimension_numbers = #tpu.dot_dimension_numbers<[1], [1], [0], [0], [0, 0, 1, 0], [], []>} : vector<5x256xf32>, vector<4x256xf32>, vector<5x4xf32> -> vector<5x4xf32>
    %c0_33 = arith.constant 0 : index
    %c0_34 = arith.constant 0 : index
    %41 = vector.load %arg6[%c0_33, %c0_34] : memref<5x5xf32, #tpu.memory_space<vmem>>, vector<5x5xf32>
    %cst_35 = arith.constant dense<0.000000e+00> : vector<5x4xf32>
    %42 = tpu.matmul %41, %40, %cst_35 {dimension_numbers = #tpu.dot_dimension_numbers<[1], [0], [0], [1], [0, 0, 1, 1], [], []>} : vector<5x5xf32>, vector<5x4xf32>, vector<5x4xf32> -> vector<5x4xf32>
    %c0_36 = arith.constant 0 : index
    %c0_37 = arith.constant 0 : index
    %43 = vector.load %arg7[%c0_36, %c0_37] : memref<5x1xf32, #tpu.memory_space<vmem>>, vector<5x1xf32>
    %44 = vector.broadcast %43 : vector<5x1xf32> to vector<5x4xf32>
    %45 = arith.addf %42, %44 : vector<5x4xf32>
    %c0_38 = arith.constant 0 : index
    %c0_39 = arith.constant 0 : index
    %46 = vector.load %arg8[%c0_38, %c0_39] : memref<4x4xf32, #tpu.memory_space<vmem>>, vector<4x4xf32>
    %cst_40 = arith.constant dense<0.000000e+00> : vector<4x5xf32>
    %47 = tpu.matmul %46, %45, %cst_40 {dimension_numbers = #tpu.dot_dimension_numbers<[1], [1], [0], [0], [0, 0, 1, 0], [], []>} : vector<4x4xf32>, vector<5x4xf32>, vector<4x5xf32> -> vector<4x5xf32>
    %c0_41 = arith.constant 0 : index
    %c0_42 = arith.constant 0 : index
    %48 = vector.load %arg9[%c0_41, %c0_42] : memref<4x1xf32, #tpu.memory_space<vmem>>, vector<4x1xf32>
    %49 = vector.broadcast %48 : vector<4x1xf32> to vector<4x5xf32>
    %50 = arith.addf %47, %49 : vector<4x5xf32>
    %cst_43 = arith.constant dense<0.000000e+00> : vector<4x256xf32>
    %51 = tpu.matmul %50, %38, %cst_43 {dimension_numbers = #tpu.dot_dimension_numbers<[1], [0], [0], [1], [0, 0, 1, 1], [], []>} : vector<4x5xf32>, vector<5x256xf32>, vector<4x256xf32> -> vector<4x256xf32>
    %c0_44 = arith.constant 0 : index
    %c0_45 = arith.constant 0 : index
    %52 = vector.load %arg10[%c0_44, %c0_45] : memref<4x4xf32, #tpu.memory_space<vmem>>, vector<4x4xf32>
    %cst_46 = arith.constant dense<0.000000e+00> : vector<4x256xf32>
    %53 = tpu.matmul %52, %51, %cst_46 {dimension_numbers = #tpu.dot_dimension_numbers<[1], [0], [0], [1], [0, 0, 1, 1], [], []>} : vector<4x4xf32>, vector<4x256xf32>, vector<4x256xf32> -> vector<4x256xf32>
    %c0_47 = arith.constant 0 : index
    %c0_48 = arith.constant 0 : index
    %54 = vector.load %arg11[%c0_47, %c0_48] : memref<4x1xf32, #tpu.memory_space<vmem>>, vector<4x1xf32>
    %55 = vector.broadcast %54 : vector<4x1xf32> to vector<4x256xf32>
    %56 = arith.addf %53, %55 : vector<4x256xf32>
    %57 = vector.extract_strided_slice %1 {offsets = [0, 256], sizes = [4, 256], strides = [1, 1]} : vector<4x1024xf32> to vector<4x256xf32>
    %58 = arith.addf %57, %56 : vector<4x256xf32>
    %59 = vector.extract_strided_slice %12 {offsets = [0, 4], sizes = [4, 4], strides = [1, 1]} : vector<4x16xf32> to vector<4x4xf32>
    %cst_49 = arith.constant dense<0.000000e+00> : vector<4x256xf32>
    %60 = tpu.matmul %59, %58, %cst_49 {dimension_numbers = #tpu.dot_dimension_numbers<[1], [0], [0], [1], [0, 0, 1, 1], [], []>} : vector<4x4xf32>, vector<4x256xf32>, vector<4x256xf32> -> vector<4x256xf32>
    %61 = arith.addf %37, %60 : vector<4x256xf32>
    %62 = vector.extract_strided_slice %6 {offsets = [0, 512], sizes = [5, 256], strides = [1, 1]} : vector<5x1024xf32> to vector<5x256xf32>
    %63 = vector.extract_strided_slice %11 {offsets = [0, 512], sizes = [4, 256], strides = [1, 1]} : vector<4x1024xf32> to vector<4x256xf32>
    %cst_50 = arith.constant dense<0.000000e+00> : vector<5x4xf32>
    %64 = tpu.matmul %62, %63, %cst_50 {dimension_numbers = #tpu.dot_dimension_numbers<[1], [1], [0], [0], [0, 0, 1, 0], [], []>} : vector<5x256xf32>, vector<4x256xf32>, vector<5x4xf32> -> vector<5x4xf32>
    %c0_51 = arith.constant 0 : index
    %c0_52 = arith.constant 0 : index
    %65 = vector.load %arg6[%c0_51, %c0_52] : memref<5x5xf32, #tpu.memory_space<vmem>>, vector<5x5xf32>
    %cst_53 = arith.constant dense<0.000000e+00> : vector<5x4xf32>
    %66 = tpu.matmul %65, %64, %cst_53 {dimension_numbers = #tpu.dot_dimension_numbers<[1], [0], [0], [1], [0, 0, 1, 1], [], []>} : vector<5x5xf32>, vector<5x4xf32>, vector<5x4xf32> -> vector<5x4xf32>
    %c0_54 = arith.constant 0 : index
    %c0_55 = arith.constant 0 : index
    %67 = vector.load %arg7[%c0_54, %c0_55] : memref<5x1xf32, #tpu.memory_space<vmem>>, vector<5x1xf32>
    %68 = vector.broadcast %67 : vector<5x1xf32> to vector<5x4xf32>
    %69 = arith.addf %66, %68 : vector<5x4xf32>
    %c0_56 = arith.constant 0 : index
    %c0_57 = arith.constant 0 : index
    %70 = vector.load %arg8[%c0_56, %c0_57] : memref<4x4xf32, #tpu.memory_space<vmem>>, vector<4x4xf32>
    %cst_58 = arith.constant dense<0.000000e+00> : vector<4x5xf32>
    %71 = tpu.matmul %70, %69, %cst_58 {dimension_numbers = #tpu.dot_dimension_numbers<[1], [1], [0], [0], [0, 0, 1, 0], [], []>} : vector<4x4xf32>, vector<5x4xf32>, vector<4x5xf32> -> vector<4x5xf32>
    %c0_59 = arith.constant 0 : index
    %c0_60 = arith.constant 0 : index
    %72 = vector.load %arg9[%c0_59, %c0_60] : memref<4x1xf32, #tpu.memory_space<vmem>>, vector<4x1xf32>
    %73 = vector.broadcast %72 : vector<4x1xf32> to vector<4x5xf32>
    %74 = arith.addf %71, %73 : vector<4x5xf32>
    %cst_61 = arith.constant dense<0.000000e+00> : vector<4x256xf32>
    %75 = tpu.matmul %74, %62, %cst_61 {dimension_numbers = #tpu.dot_dimension_numbers<[1], [0], [0], [1], [0, 0, 1, 1], [], []>} : vector<4x5xf32>, vector<5x256xf32>, vector<4x256xf32> -> vector<4x256xf32>
    %c0_62 = arith.constant 0 : index
    %c0_63 = arith.constant 0 : index
    %76 = vector.load %arg10[%c0_62, %c0_63] : memref<4x4xf32, #tpu.memory_space<vmem>>, vector<4x4xf32>
    %cst_64 = arith.constant dense<0.000000e+00> : vector<4x256xf32>
    %77 = tpu.matmul %76, %75, %cst_64 {dimension_numbers = #tpu.dot_dimension_numbers<[1], [0], [0], [1], [0, 0, 1, 1], [], []>} : vector<4x4xf32>, vector<4x256xf32>, vector<4x256xf32> -> vector<4x256xf32>
    %c0_65 = arith.constant 0 : index
    %c0_66 = arith.constant 0 : index
    %78 = vector.load %arg11[%c0_65, %c0_66] : memref<4x1xf32, #tpu.memory_space<vmem>>, vector<4x1xf32>
    %79 = vector.broadcast %78 : vector<4x1xf32> to vector<4x256xf32>
    %80 = arith.addf %77, %79 : vector<4x256xf32>
    %81 = vector.extract_strided_slice %1 {offsets = [0, 512], sizes = [4, 256], strides = [1, 1]} : vector<4x1024xf32> to vector<4x256xf32>
    %82 = arith.addf %81, %80 : vector<4x256xf32>
    %83 = vector.extract_strided_slice %12 {offsets = [0, 8], sizes = [4, 4], strides = [1, 1]} : vector<4x16xf32> to vector<4x4xf32>
    %cst_67 = arith.constant dense<0.000000e+00> : vector<4x256xf32>
    %84 = tpu.matmul %83, %82, %cst_67 {dimension_numbers = #tpu.dot_dimension_numbers<[1], [0], [0], [1], [0, 0, 1, 1], [], []>} : vector<4x4xf32>, vector<4x256xf32>, vector<4x256xf32> -> vector<4x256xf32>
    %85 = arith.addf %61, %84 : vector<4x256xf32>
    %86 = vector.extract_strided_slice %6 {offsets = [0, 768], sizes = [5, 256], strides = [1, 1]} : vector<5x1024xf32> to vector<5x256xf32>
    %87 = vector.extract_strided_slice %11 {offsets = [0, 768], sizes = [4, 256], strides = [1, 1]} : vector<4x1024xf32> to vector<4x256xf32>
    %cst_68 = arith.constant dense<0.000000e+00> : vector<5x4xf32>
    %88 = tpu.matmul %86, %87, %cst_68 {dimension_numbers = #tpu.dot_dimension_numbers<[1], [1], [0], [0], [0, 0, 1, 0], [], []>} : vector<5x256xf32>, vector<4x256xf32>, vector<5x4xf32> -> vector<5x4xf32>
    %c0_69 = arith.constant 0 : index
    %c0_70 = arith.constant 0 : index
    %89 = vector.load %arg6[%c0_69, %c0_70] : memref<5x5xf32, #tpu.memory_space<vmem>>, vector<5x5xf32>
    %cst_71 = arith.constant dense<0.000000e+00> : vector<5x4xf32>
    %90 = tpu.matmul %89, %88, %cst_71 {dimension_numbers = #tpu.dot_dimension_numbers<[1], [0], [0], [1], [0, 0, 1, 1], [], []>} : vector<5x5xf32>, vector<5x4xf32>, vector<5x4xf32> -> vector<5x4xf32>
    %c0_72 = arith.constant 0 : index
    %c0_73 = arith.constant 0 : index
    %91 = vector.load %arg7[%c0_72, %c0_73] : memref<5x1xf32, #tpu.memory_space<vmem>>, vector<5x1xf32>
    %92 = vector.broadcast %91 : vector<5x1xf32> to vector<5x4xf32>
    %93 = arith.addf %90, %92 : vector<5x4xf32>
    %c0_74 = arith.constant 0 : index
    %c0_75 = arith.constant 0 : index
    %94 = vector.load %arg8[%c0_74, %c0_75] : memref<4x4xf32, #tpu.memory_space<vmem>>, vector<4x4xf32>
    %cst_76 = arith.constant dense<0.000000e+00> : vector<4x5xf32>
    %95 = tpu.matmul %94, %93, %cst_76 {dimension_numbers = #tpu.dot_dimension_numbers<[1], [1], [0], [0], [0, 0, 1, 0], [], []>} : vector<4x4xf32>, vector<5x4xf32>, vector<4x5xf32> -> vector<4x5xf32>
    %c0_77 = arith.constant 0 : index
    %c0_78 = arith.constant 0 : index
    %96 = vector.load %arg9[%c0_77, %c0_78] : memref<4x1xf32, #tpu.memory_space<vmem>>, vector<4x1xf32>
    %97 = vector.broadcast %96 : vector<4x1xf32> to vector<4x5xf32>
    %98 = arith.addf %95, %97 : vector<4x5xf32>
    %cst_79 = arith.constant dense<0.000000e+00> : vector<4x256xf32>
    %99 = tpu.matmul %98, %86, %cst_79 {dimension_numbers = #tpu.dot_dimension_numbers<[1], [0], [0], [1], [0, 0, 1, 1], [], []>} : vector<4x5xf32>, vector<5x256xf32>, vector<4x256xf32> -> vector<4x256xf32>
    %c0_80 = arith.constant 0 : index
    %c0_81 = arith.constant 0 : index
    %100 = vector.load %arg10[%c0_80, %c0_81] : memref<4x4xf32, #tpu.memory_space<vmem>>, vector<4x4xf32>
    %cst_82 = arith.constant dense<0.000000e+00> : vector<4x256xf32>
    %101 = tpu.matmul %100, %99, %cst_82 {dimension_numbers = #tpu.dot_dimension_numbers<[1], [0], [0], [1], [0, 0, 1, 1], [], []>} : vector<4x4xf32>, vector<4x256xf32>, vector<4x256xf32> -> vector<4x256xf32>
    %c0_83 = arith.constant 0 : index
    %c0_84 = arith.constant 0 : index
    %102 = vector.load %arg11[%c0_83, %c0_84] : memref<4x1xf32, #tpu.memory_space<vmem>>, vector<4x1xf32>
    %103 = vector.broadcast %102 : vector<4x1xf32> to vector<4x256xf32>
    %104 = arith.addf %101, %103 : vector<4x256xf32>
    %105 = vector.extract_strided_slice %1 {offsets = [0, 768], sizes = [4, 256], strides = [1, 1]} : vector<4x1024xf32> to vector<4x256xf32>
    %106 = arith.addf %105, %104 : vector<4x256xf32>
    %107 = vector.extract_strided_slice %12 {offsets = [0, 12], sizes = [4, 4], strides = [1, 1]} : vector<4x16xf32> to vector<4x4xf32>
    %cst_85 = arith.constant dense<0.000000e+00> : vector<4x256xf32>
    %108 = tpu.matmul %107, %106, %cst_85 {dimension_numbers = #tpu.dot_dimension_numbers<[1], [0], [0], [1], [0, 0, 1, 1], [], []>} : vector<4x4xf32>, vector<4x256xf32>, vector<4x256xf32> -> vector<4x256xf32>
    %109 = arith.addf %85, %108 : vector<4x256xf32>
    %c0_86 = arith.constant 0 : index
    %c0_87 = arith.constant 0 : index
    %110 = vector.load %arg13[%c0_86, %c0_87] : memref<4x1xf32, #tpu.memory_space<vmem>>, vector<4x1xf32>
    %111 = vector.broadcast %110 : vector<4x1xf32> to vector<4x256xf32>
    %112 = arith.addf %109, %111 : vector<4x256xf32>
    %c0_88 = arith.constant 0 : index
    %c0_89 = arith.constant 0 : index
    %c0_90 = arith.constant 0 : index
    %113 = vector.load %arg14[%c0_88, %c0_89, %c0_90] : memref<1x4x256xf32, #tpu.memory_space<vmem>>, vector<1x4x256xf32>
    %114 = vector.shape_cast %113 : vector<1x4x256xf32> to vector<4x256xf32>
    %115 = vector.shape_cast %112 : vector<4x256xf32> to vector<1x4x256xf32>
    tpu.vector_store %arg14[%c0_88, %c0_89, %c0_90], %115 {strides = array<i32>} : memref<1x4x256xf32, #tpu.memory_space<vmem>>, vector<1x4x256xf32>,
    return
  }
  func.func @transform_0(%arg0: i32) -> (i32, i32, i32) {
    %c0_i32 = arith.constant 0 : i32
    %c0_i32_0 = arith.constant 0 : i32
    %c0_i32_1 = arith.constant 0 : i32
    return %arg0, %c0_i32, %c0_i32_0 : i32, i32, i32
  }
  func.func @transform_1(%arg0: i32) -> (i32, i32) {
    %c0_i32 = arith.constant 0 : i32
    %c0_i32_0 = arith.constant 0 : i32
    %c0_i32_1 = arith.constant 0 : i32
    return %c0_i32, %c0_i32_0 : i32, i32
  }
  func.func @transform_2(%arg0: i32) -> (i32, i32) {
    %c0_i32 = arith.constant 0 : i32
    %c0_i32_0 = arith.constant 0 : i32
    %c0_i32_1 = arith.constant 0 : i32
    return %c0_i32, %c0_i32_0 : i32, i32
  }
  func.func @transform_3(%arg0: i32) -> (i32, i32) {
    %c0_i32 = arith.constant 0 : i32
    %c0_i32_0 = arith.constant 0 : i32
    %c0_i32_1 = arith.constant 0 : i32
    return %c0_i32, %c0_i32_0 : i32, i32
  }
  func.func @transform_4(%arg0: i32) -> (i32, i32) {
    %c0_i32 = arith.constant 0 : i32
    %c0_i32_0 = arith.constant 0 : i32
    %c0_i32_1 = arith.constant 0 : i32
    return %c0_i32, %c0_i32_0 : i32, i32
  }
  func.func @transform_5(%arg0: i32) -> (i32, i32) {
    %c0_i32 = arith.constant 0 : i32
    %c0_i32_0 = arith.constant 0 : i32
    %c0_i32_1 = arith.constant 0 : i32
    return %c0_i32, %c0_i32_0 : i32, i32
  }
  func.func @transform_6(%arg0: i32) -> (i32, i32) {
    %c0_i32 = arith.constant 0 : i32
    %c0_i32_0 = arith.constant 0 : i32
    %c0_i32_1 = arith.constant 0 : i32
    return %c0_i32, %c0_i32_0 : i32, i32
  }
  func.func @transform_7(%arg0: i32) -> (i32, i32) {
    %c0_i32 = arith.constant 0 : i32
    %c0_i32_0 = arith.constant 0 : i32
    %c0_i32_1 = arith.constant 0 : i32
    return %c0_i32, %c0_i32_0 : i32, i32
  }
  func.func @transform_8(%arg0: i32) -> (i32, i32) {
    %c0_i32 = arith.constant 0 : i32
    %c0_i32_0 = arith.constant 0 : i32
    %c0_i32_1 = arith.constant 0 : i32
    return %c0_i32, %c0_i32_0 : i32, i32
  }
  func.func @transform_9(%arg0: i32) -> (i32, i32) {
    %c0_i32 = arith.constant 0 : i32
    %c0_i32_0 = arith.constant 0 : i32
    %c0_i32_1 = arith.constant 0 : i32
    return %c0_i32, %c0_i32_0 : i32, i32
  }
  func.func @transform_10(%arg0: i32) -> (i32, i32) {
    %c0_i32 = arith.constant 0 : i32
    %c0_i32_0 = arith.constant 0 : i32
    %c0_i32_1 = arith.constant 0 : i32
    return %c0_i32, %c0_i32_0 : i32, i32
  }
  func.func @transform_11(%arg0: i32) -> (i32, i32) {
    %c0_i32 = arith.constant 0 : i32
    %c0_i32_0 = arith.constant 0 : i32
    %c0_i32_1 = arith.constant 0 : i32
    return %c0_i32, %c0_i32_0 : i32, i32
  }
  func.func @transform_12(%arg0: i32) -> (i32, i32) {
    %c0_i32 = arith.constant 0 : i32
    %c0_i32_0 = arith.constant 0 : i32
    %c0_i32_1 = arith.constant 0 : i32
    return %c0_i32, %c0_i32_0 : i32, i32
  }
  func.func @transform_13(%arg0: i32) -> (i32, i32, i32) {
    %c0_i32 = arith.constant 0 : i32
    %c0_i32_0 = arith.constant 0 : i32
    %c0_i32_1 = arith.constant 0 : i32
    return %arg0, %c0_i32, %c0_i32_0 : i32, i32, i32
  }
}

</mosaic_0001>

<llo_original>
// kernel: tpu_custom_call.1
$region0: #{tpu_custom_call.1}
  #allocation0 [shape = 'u32[]', space=smem, size = 0x4, offset = 0x4, fixed_abs, tag = 'smem constant byte address 0x4 - core index']
  #allocation1 [shape = 'u32[72,128]{1,0:T(1,128)}', space=vmem, size = 0x9000, scoped, tag = 'internal scratch']
  %s0 = inlined_call_operand.hbm [shape: f32[2,4,1024], index: 0, kind: input, shape index: {}]
  %s1 = inlined_call_operand.vmem [shape: f32[5,4], index: 1, kind: input, shape index: {}]
  %s2 = inlined_call_operand.vmem [shape: f32[5,1], index: 2, kind: input, shape index: {}]
  %s3 = inlined_call_operand.vmem [shape: f32[4,4], index: 3, kind: input, shape index: {}]
  %s4 = inlined_call_operand.vmem [shape: f32[4,1], index: 4, kind: input, shape index: {}]
  %s5 = inlined_call_operand.vmem [shape: f32[5,5], index: 5, kind: input, shape index: {}]
  %s6 = inlined_call_operand.vmem [shape: f32[5,1], index: 6, kind: input, shape index: {}]
  %s7 = inlined_call_operand.vmem [shape: f32[4,4], index: 7, kind: input, shape index: {}]
  %s8 = inlined_call_operand.vmem [shape: f32[4,1], index: 8, kind: input, shape index: {}]
  %s9 = inlined_call_operand.vmem [shape: f32[4,4], index: 9, kind: input, shape index: {}]
  %s10 = inlined_call_operand.vmem [shape: f32[4,1], index: 10, kind: input, shape index: {}]
  %s11 = inlined_call_operand.vmem [shape: f32[4,16], index: 11, kind: input, shape index: {}]
  %s12 = inlined_call_operand.vmem [shape: f32[4,1], index: 12, kind: input, shape index: {}]
  %s13 = inlined_call_operand.hbm [shape: f32[2,4,256], index: 13, kind: output, shape index: {}]
  %s14 = sld [smem:[#allocation0]]
  $region89: #{tpu_custom_call.1} parent=0
    _
  %s16 = ssub.s32 1, %s14
  %s17 = scalar_select 0, %s16, %s14
  $region1: #{tpu_custom_call.1} parent=0
    #allocation2 [shape = 'u8[32768]{0}', space=vmem, size = 0x8000, scoped, tag = 'input window, operand 0']
    #allocation3 [shape = 's32[2]{0}', space=sflag, size = 0x8, scoped, tag = 'scoped memory for tpu_custom_call.1']
    #allocation4 [shape = 's32[2]{0}', space=sflag, size = 0x8, scoped, tag = 'scoped memory for tpu_custom_call.1']
    #allocation5 [shape = 'u8[8192]{0}', space=vmem, size = 0x2000, scoped, tag = 'output window, operand 0']
    %18 = vsyncpa [#allocation3], 0
    %s19 = scalar_lea.sflag [#allocation3], 1
    %20 = vsyncpa %s19, 0
    %21 = vsyncpa [#allocation4], 0
    %s22 = scalar_lea.sflag [#allocation4], 1
    %23 = vsyncpa %s22, 0
    loop: start=0, step=1, limit=4
    $region2: #{tpu_custom_call.1} parent=1 // loop_pre_header
      _
    $region3: #{tpu_custom_call.1} parent=1 // loop_header
      %s25 = sphi 0, %s29
      %p26 = scmp.ge.s32.totalorder %s25, 4
      %s35 = sphi 0, %s37
      %s38 = sphi 0, %s35
      %s39 = sphi 0, %s38
      %s55 = sphi 0, %s39
      %s59 = sphi 0, %s59
      %s61 = sphi 0, %s59
      %s62 = sphi 0, %s61
      %s76 = sphi 0, %s62
      %s80 = sphi 0, %s80
      %s82 = sphi 0, %s80
      %s83 = sphi 0, %s82
      %s97 = sphi 0, %s83
      %s101 = sphi 0, %s101
      %s103 = sphi 0, %s101
      %s104 = sphi 0, %s103
      %s118 = sphi 0, %s104
      %s122 = sphi 0, %s122
      %s124 = sphi 0, %s122
      %s125 = sphi 0, %s124
      %s139 = sphi 0, %s125
      %s143 = sphi 0, %s143
      %s145 = sphi 0, %s143
      %s146 = sphi 0, %s145
      %s160 = sphi 0, %s146
      %s164 = sphi 0, %s164
      %s166 = sphi 0, %s164
      %s167 = sphi 0, %s166
      %s181 = sphi 0, %s167
      %s185 = sphi 0, %s185
      %s187 = sphi 0, %s185
      %s188 = sphi 0, %s187
      %s202 = sphi 0, %s188
      %s206 = sphi 0, %s206
      %s208 = sphi 0, %s206
      %s209 = sphi 0, %s208
      %s223 = sphi 0, %s209
      %s227 = sphi 0, %s227
      %s229 = sphi 0, %s227
      %s230 = sphi 0, %s229
      %s244 = sphi 0, %s230
      %s248 = sphi 0, %s248
      %s250 = sphi 0, %s248
      %s251 = sphi 0, %s250
      %s265 = sphi 0, %s251
      %s269 = sphi 0, %s269
      %s271 = sphi 0, %s269
      %s272 = sphi 0, %s271
      %s286 = sphi 0, %s272
      %s290 = sphi 0, %s290
      %s292 = sphi 0, %s290
      %s293 = sphi 0, %s292
      %s307 = sphi 0, %s293
      %s313 = sphi 0, %s315
      %s316 = sphi 0, %s313
      %s317 = sphi 0, %s316
      %s333 = sphi 0, %s317
    $region4: #{tpu_custom_call.1} parent=1 // loop_header_branch
      %28 = sbr.rel (%p26) target = $region8
    $region5: #{tpu_custom_call.1} parent=1 // loop_body
      %s30 = ssub.s32 %s25, 1
      %s31 = ssub.s32 %s25, 2
      %s32 = sadd.s32 %s25, 1
      %s33 = ssub.s32 %s25, %s32
      %p34 = scmp.eq.s32.totalorder %s33, 0
      %s36 = sadd.s32 %s35, 1
      %s37 = scalar_select %p34, %s35, %s36
      %p40 = pneg %p34
      %p41 = scmp.eq.s32.totalorder %s25, 1
      %p42 = por %p40, %p41
      %p43 = scmp.ne.s32.totalorder %s35, %s38
      %p44 = scmp.eq.s32.totalorder %s25, 0
      %p45 = por %p43, %p44
      %p46 = scmp.ne.s32.totalorder %s35, %s38
      %p47 = scmp.eq.s32.totalorder %s30, 1
      %p48 = por %p46, %p47
      %p49 = scmp.ne.s32.totalorder %s38, %s39
      %p50 = scmp.eq.s32.totalorder %s30, 0
      %p51 = por %p49, %p50
      %p52 = scmp.ne.s32.totalorder %s38, %s39
      %p53 = scmp.eq.s32.totalorder %s31, 1
      %p54 = por %p52, %p53
      %p56 = scmp.ne.s32.totalorder %s39, %s55
      %p57 = scmp.eq.s32.totalorder %s31, 0
      %p58 = por %p56, %p57
      %s60 = sadd.s32 %s59, 1
      %p63 = scmp.eq.s32.totalorder %s25, 1
      %p64 = scmp.ne.s32.totalorder %s59, %s61
      %p65 = scmp.eq.s32.totalorder %s25, 0
      %p66 = por %p64, %p65
      %p67 = scmp.ne.s32.totalorder %s59, %s61
      %p68 = scmp.eq.s32.totalorder %s30, 1
      %p69 = por %p67, %p68
      %p70 = scmp.ne.s32.totalorder %s61, %s62
      %p71 = scmp.eq.s32.totalorder %s30, 0
      %p72 = por %p70, %p71
      %p73 = scmp.ne.s32.totalorder %s61, %s62
      %p74 = scmp.eq.s32.totalorder %s31, 1
      %p75 = por %p73, %p74
      %p77 = scmp.ne.s32.totalorder %s62, %s76
      %p78 = scmp.eq.s32.totalorder %s31, 0
      %p79 = por %p77, %p78
      %s81 = sadd.s32 %s80, 1
      %p84 = scmp.eq.s32.totalorder %s25, 1
      %p85 = scmp.ne.s32.totalorder %s80, %s82
      %p86 = scmp.eq.s32.totalorder %s25, 0
      %p87 = por %p85, %p86
      %p88 = scmp.ne.s32.totalorder %s80, %s82
      %p89 = scmp.eq.s32.totalorder %s30, 1
      %p90 = por %p88, %p89
      %p91 = scmp.ne.s32.totalorder %s82, %s83
      %p92 = scmp.eq.s32.totalorder %s30, 0
      %p93 = por %p91, %p92
      %p94 = scmp.ne.s32.totalorder %s82, %s83
      %p95 = scmp.eq.s32.totalorder %s31, 1
      %p96 = por %p94, %p95
      %p98 = scmp.ne.s32.totalorder %s83, %s97
      %p99 = scmp.eq.s32.totalorder %s31, 0
      %p100 = por %p98, %p99
      %s102 = sadd.s32 %s101, 1
      %p105 = scmp.eq.s32.totalorder %s25, 1
      %p106 = scmp.ne.s32.totalorder %s101, %s103
      %p107 = scmp.eq.s32.totalorder %s25, 0
      %p108 = por %p106, %p107
      %p109 = scmp.ne.s32.totalorder %s101, %s103
      %p110 = scmp.eq.s32.totalorder %s30, 1
      %p111 = por %p109, %p110
      %p112 = scmp.ne.s32.totalorder %s103, %s104
      %p113 = scmp.eq.s32.totalorder %s30, 0
      %p114 = por %p112, %p113
      %p115 = scmp.ne.s32.totalorder %s103, %s104
      %p116 = scmp.eq.s32.totalorder %s31, 1
      %p117 = por %p115, %p116
      %p119 = scmp.ne.s32.totalorder %s104, %s118
      %p120 = scmp.eq.s32.totalorder %s31, 0
      %p121 = por %p119, %p120
      %s123 = sadd.s32 %s122, 1
      %p126 = scmp.eq.s32.totalorder %s25, 1
      %p127 = scmp.ne.s32.totalorder %s122, %s124
      %p128 = scmp.eq.s32.totalorder %s25, 0
      %p129 = por %p127, %p128
      %p130 = scmp.ne.s32.totalorder %s122, %s124
      %p131 = scmp.eq.s32.totalorder %s30, 1
      %p132 = por %p130, %p131
      %p133 = scmp.ne.s32.totalorder %s124, %s125
      %p134 = scmp.eq.s32.totalorder %s30, 0
      %p135 = por %p133, %p134
      %p136 = scmp.ne.s32.totalorder %s124, %s125
      %p137 = scmp.eq.s32.totalorder %s31, 1
      %p138 = por %p136, %p137
      %p140 = scmp.ne.s32.totalorder %s125, %s139
      %p141 = scmp.eq.s32.totalorder %s31, 0
      %p142 = por %p140, %p141
      %s144 = sadd.s32 %s143, 1
      %p147 = scmp.eq.s32.totalorder %s25, 1
      %p148 = scmp.ne.s32.totalorder %s143, %s145
      %p149 = scmp.eq.s32.totalorder %s25, 0
      %p150 = por %p148, %p149
      %p151 = scmp.ne.s32.totalorder %s143, %s145
      %p152 = scmp.eq.s32.totalorder %s30, 1
      %p153 = por %p151, %p152
      %p154 = scmp.ne.s32.totalorder %s145, %s146
      %p155 = scmp.eq.s32.totalorder %s30, 0
      %p156 = por %p154, %p155
      %p157 = scmp.ne.s32.totalorder %s145, %s146
      %p158 = scmp.eq.s32.totalorder %s31, 1
      %p159 = por %p157, %p158
      %p161 = scmp.ne.s32.totalorder %s146, %s160
      %p162 = scmp.eq.s32.totalorder %s31, 0
      %p163 = por %p161, %p162
      %s165 = sadd.s32 %s164, 1
      %p168 = scmp.eq.s32.totalorder %s25, 1
      %p169 = scmp.ne.s32.totalorder %s164, %s166
      %p170 = scmp.eq.s32.totalorder %s25, 0
      %p171 = por %p169, %p170
      %p172 = scmp.ne.s32.totalorder %s164, %s166
      %p173 = scmp.eq.s32.totalorder %s30, 1
      %p174 = por %p172, %p173
      %p175 = scmp.ne.s32.totalorder %s166, %s167
      %p176 = scmp.eq.s32.totalorder %s30, 0
      %p177 = por %p175, %p176
      %p178 = scmp.ne.s32.totalorder %s166, %s167
      %p179 = scmp.eq.s32.totalorder %s31, 1
      %p180 = por %p178, %p179
      %p182 = scmp.ne.s32.totalorder %s167, %s181
      %p183 = scmp.eq.s32.totalorder %s31, 0
      %p184 = por %p182, %p183
      %s186 = sadd.s32 %s185, 1
      %p189 = scmp.eq.s32.totalorder %s25, 1
      %p190 = scmp.ne.s32.totalorder %s185, %s187
      %p191 = scmp.eq.s32.totalorder %s25, 0
      %p192 = por %p190, %p191
      %p193 = scmp.ne.s32.totalorder %s185, %s187
      %p194 = scmp.eq.s32.totalorder %s30, 1
      %p195 = por %p193, %p194
      %p196 = scmp.ne.s32.totalorder %s187, %s188
      %p197 = scmp.eq.s32.totalorder %s30, 0
      %p198 = por %p196, %p197
      %p199 = scmp.ne.s32.totalorder %s187, %s188
      %p200 = scmp.eq.s32.totalorder %s31, 1
      %p201 = por %p199, %p200
      %p203 = scmp.ne.s32.totalorder %s188, %s202
      %p204 = scmp.eq.s32.totalorder %s31, 0
      %p205 = por %p203, %p204
      %s207 = sadd.s32 %s206, 1
      %p210 = scmp.eq.s32.totalorder %s25, 1
      %p211 = scmp.ne.s32.totalorder %s206, %s208
      %p212 = scmp.eq.s32.totalorder %s25, 0
      %p213 = por %p211, %p212
      %p214 = scmp.ne.s32.totalorder %s206, %s208
      %p215 = scmp.eq.s32.totalorder %s30, 1
      %p216 = por %p214, %p215
      %p217 = scmp.ne.s32.totalorder %s208, %s209
      %p218 = scmp.eq.s32.totalorder %s30, 0
      %p219 = por %p217, %p218
      %p220 = scmp.ne.s32.totalorder %s208, %s209
      %p221 = scmp.eq.s32.totalorder %s31, 1
      %p222 = por %p220, %p221
      %p224 = scmp.ne.s32.totalorder %s209, %s223
      %p225 = scmp.eq.s32.totalorder %s31, 0
      %p226 = por %p224, %p225
      %s228 = sadd.s32 %s227, 1
      %p231 = scmp.eq.s32.totalorder %s25, 1
      %p232 = scmp.ne.s32.totalorder %s227, %s229
      %p233 = scmp.eq.s32.totalorder %s25, 0
      %p234 = por %p232, %p233
      %p235 = scmp.ne.s32.totalorder %s227, %s229
      %p236 = scmp.eq.s32.totalorder %s30, 1
      %p237 = por %p235, %p236
      %p238 = scmp.ne.s32.totalorder %s229, %s230
      %p239 = scmp.eq.s32.totalorder %s30, 0
      %p240 = por %p238, %p239
      %p241 = scmp.ne.s32.totalorder %s229, %s230
      %p242 = scmp.eq.s32.totalorder %s31, 1
      %p243 = por %p241, %p242
      %p245 = scmp.ne.s32.totalorder %s230, %s244
      %p246 = scmp.eq.s32.totalorder %s31, 0
      %p247 = por %p245, %p246
      %s249 = sadd.s32 %s248, 1
      %p252 = scmp.eq.s32.totalorder %s25, 1
      %p253 = scmp.ne.s32.totalorder %s248, %s250
      %p254 = scmp.eq.s32.totalorder %s25, 0
      %p255 = por %p253, %p254
      %p256 = scmp.ne.s32.totalorder %s248, %s250
      %p257 = scmp.eq.s32.totalorder %s30, 1
      %p258 = por %p256, %p257
      %p259 = scmp.ne.s32.totalorder %s250, %s251
      %p260 = scmp.eq.s32.totalorder %s30, 0
      %p261 = por %p259, %p260
      %p262 = scmp.ne.s32.totalorder %s250, %s251
      %p263 = scmp.eq.s32.totalorder %s31, 1
      %p264 = por %p262, %p263
      %p266 = scmp.ne.s32.totalorder %s251, %s265
      %p267 = scmp.eq.s32.totalorder %s31, 0
      %p268 = por %p266, %p267
      %s270 = sadd.s32 %s269, 1
      %p273 = scmp.eq.s32.totalorder %s25, 1
      %p274 = scmp.ne.s32.totalorder %s269, %s271
      %p275 = scmp.eq.s32.totalorder %s25, 0
      %p276 = por %p274, %p275
      %p277 = scmp.ne.s32.totalorder %s269, %s271
      %p278 = scmp.eq.s32.totalorder %s30, 1
      %p279 = por %p277, %p278
      %p280 = scmp.ne.s32.totalorder %s271, %s272
      %p281 = scmp.eq.s32.totalorder %s30, 0
      %p282 = por %p280, %p281
      %p283 = scmp.ne.s32.totalorder %s271, %s272
      %p284 = scmp.eq.s32.totalorder %s31, 1
      %p285 = por %p283, %p284
      %p287 = scmp.ne.s32.totalorder %s272, %s286
      %p288 = scmp.eq.s32.totalorder %s31, 0
      %p289 = por %p287, %p288
      %s291 = sadd.s32 %s290, 1
      %p294 = scmp.eq.s32.totalorder %s25, 1
      %p295 = scmp.ne.s32.totalorder %s290, %s292
      %p296 = scmp.eq.s32.totalorder %s25, 0
      %p297 = por %p295, %p296
      %p298 = scmp.ne.s32.totalorder %s290, %s292
      %p299 = scmp.eq.s32.totalorder %s30, 1
      %p300 = por %p298, %p299
      %p301 = scmp.ne.s32.totalorder %s292, %s293
      %p302 = scmp.eq.s32.totalorder %s30, 0
      %p303 = por %p301, %p302
      %p304 = scmp.ne.s32.totalorder %s292, %s293
      %p305 = scmp.eq.s32.totalorder %s31, 1
      %p306 = por %p304, %p305
      %p308 = scmp.ne.s32.totalorder %s293, %s307
      %p309 = scmp.eq.s32.totalorder %s31, 0
      %p310 = por %p308, %p309
      %s311 = ssub.s32 %s25, %s32
      %p312 = scmp.eq.s32.totalorder %s311, 0
      %s314 = sadd.s32 %s313, 1
      %s315 = scalar_select %p312, %s313, %s314
      %p318 = pneg %p312
      %p319 = scmp.eq.s32.totalorder %s25, 1
      %p320 = por %p318, %p319
      %p321 = scmp.ne.s32.totalorder %s313, %s316
      %p322 = scmp.eq.s32.totalorder %s25, 0
      %p323 = por %p321, %p322
      %p324 = scmp.ne.s32.totalorder %s313, %s316
      %p325 = scmp.eq.s32.totalorder %s30, 1
      %p326 = por %p324, %p325
      %p327 = scmp.ne.s32.totalorder %s316, %s317
      %p328 = scmp.eq.s32.totalorder %s30, 0
      %p329 = por %p327, %p328
      %p330 = scmp.ne.s32.totalorder %s316, %s317
      %p331 = scmp.eq.s32.totalorder %s31, 1
      %p332 = por %p330, %p331
      %p334 = scmp.ne.s32.totalorder %s317, %s333
      %p335 = scmp.eq.s32.totalorder %s31, 0
      %p336 = por %p334, %p335
      %p337 = scmp.le.s32.totalorder 1, %s25
      %p338 = scmp.lt.s32.totalorder %s25, 3
      %p339 = pnand %p337, %p338
      %p340 = pneg %p339
      // Predicated region
      $region9: #{tpu_custom_call.1} parent=5 // pred_check
        _
      $region10: #{tpu_custom_call.1} parent=5 // pred_check_branch
        %342 = sbr.rel (%p339) target = $region12
      $region11: #{tpu_custom_call.1} parent=5 // pred_region
        %s343 = ssub.s32 %s25, 1
        // Predicated region
        $region13: #{tpu_custom_call.1} parent=11 // pred_check
          %p344 = pneg %p72
        $region14: #{tpu_custom_call.1} parent=11 // pred_check_branch
          %346 = sbr.rel (%p344) target = $region16
        $region15: #{tpu_custom_call.1} parent=11 // pred_region
          _
        $region16: #{tpu_custom_call.1} parent=11 // pred_fallthru
          _
        // Predicated region
        $region17: #{tpu_custom_call.1} parent=11 // pred_check
          %p347 = pneg %p93
        $region18: #{tpu_custom_call.1} parent=11 // pred_check_branch
          %349 = sbr.rel (%p347) target = $region20
        $region19: #{tpu_custom_call.1} parent=11 // pred_region
          _
        $region20: #{tpu_custom_call.1} parent=11 // pred_fallthru
          _
        // Predicated region
        $region21: #{tpu_custom_call.1} parent=11 // pred_check
          %p350 = pneg %p114
        $region22: #{tpu_custom_call.1} parent=11 // pred_check_branch
          %352 = sbr.rel (%p350) target = $region24
        $region23: #{tpu_custom_call.1} parent=11 // pred_region
          _
        $region24: #{tpu_custom_call.1} parent=11 // pred_fallthru
          _
        // Predicated region
        $region25: #{tpu_custom_call.1} parent=11 // pred_check
          %p353 = pneg %p135
        $region26: #{tpu_custom_call.1} parent=11 // pred_check_branch
          %355 = sbr.rel (%p353) target = $region28
        $region27: #{tpu_custom_call.1} parent=11 // pred_region
          _
        $region28: #{tpu_custom_call.1} parent=11 // pred_fallthru
          _
        // Predicated region
        $region29: #{tpu_custom_call.1} parent=11 // pred_check
          %p356 = pneg %p156
        $region30: #{tpu_custom_call.1} parent=11 // pred_check_branch
          %358 = sbr.rel (%p356) target = $region32
        $region31: #{tpu_custom_call.1} parent=11 // pred_region
          _
        $region32: #{tpu_custom_call.1} parent=11 // pred_fallthru
          _
        // Predicated region
        $region33: #{tpu_custom_call.1} parent=11 // pred_check
          %p359 = pneg %p177
        $region34: #{tpu_custom_call.1} parent=11 // pred_check_branch
          %361 = sbr.rel (%p359) target = $region36
        $region35: #{tpu_custom_call.1} parent=11 // pred_region
          _
        $region36: #{tpu_custom_call.1} parent=11 // pred_fallthru
          _
        // Predicated region
        $region37: #{tpu_custom_call.1} parent=11 // pred_check
          %p362 = pneg %p198
        $region38: #{tpu_custom_call.1} parent=11 // pred_check_branch
          %364 = sbr.rel (%p362) target = $region40
        $region39: #{tpu_custom_call.1} parent=11 // pred_region
          _
        $region40: #{tpu_custom_call.1} parent=11 // pred_fallthru
          _
        // Predicated region
        $region41: #{tpu_custom_call.1} parent=11 // pred_check
          %p365 = pneg %p219
        $region42: #{tpu_custom_call.1} parent=11 // pred_check_branch
          %367 = sbr.rel (%p365) target = $region44
        $region43: #{tpu_custom_call.1} parent=11 // pred_region
          _
        $region44: #{tpu_custom_call.1} parent=11 // pred_fallthru
          _
        // Predicated region
        $region45: #{tpu_custom_call.1} parent=11 // pred_check
          %p368 = pneg %p240
        $region46: #{tpu_custom_call.1} parent=11 // pred_check_branch
          %370 = sbr.rel (%p368) target = $region48
        $region47: #{tpu_custom_call.1} parent=11 // pred_region
          _
        $region48: #{tpu_custom_call.1} parent=11 // pred_fallthru
          _
        // Predicated region
        $region49: #{tpu_custom_call.1} parent=11 // pred_check
          %p371 = pneg %p261
        $region50: #{tpu_custom_call.1} parent=11 // pred_check_branch
          %373 = sbr.rel (%p371) target = $region52
        $region51: #{tpu_custom_call.1} parent=11 // pred_region
          _
        $region52: #{tpu_custom_call.1} parent=11 // pred_fallthru
          _
        // Predicated region
        $region53: #{tpu_custom_call.1} parent=11 // pred_check
          %p374 = pneg %p282
        $region54: #{tpu_custom_call.1} parent=11 // pred_check_branch
          %376 = sbr.rel (%p374) target = $region56
        $region55: #{tpu_custom_call.1} parent=11 // pred_region
          _
        $region56: #{tpu_custom_call.1} parent=11 // pred_fallthru
          _
        // Predicated region
        $region57: #{tpu_custom_call.1} parent=11 // pred_check
          %p377 = pneg %p303
        $region58: #{tpu_custom_call.1} parent=11 // pred_check_branch
          %379 = sbr.rel (%p377) target = $region60
        $region59: #{tpu_custom_call.1} parent=11 // pred_region
          _
        $region60: #{tpu_custom_call.1} parent=11 // pred_fallthru
          _
      $region12: #{tpu_custom_call.1} parent=5 // pred_fallthru
        _
      %p380 = scmp.lt.s32.totalorder %s25, 2
      // Predicated region
      $region61: #{tpu_custom_call.1} parent=5 // pred_check
        %p381 = pneg %p380
      $region62: #{tpu_custom_call.1} parent=5 // pred_check_branch
        %383 = sbr.rel (%p381) target = $region64
      $region63: #{tpu_custom_call.1} parent=5 // pred_region
        // Predicated region
        $region65: #{tpu_custom_call.1} parent=63 // pred_check
          %p384 = pneg %p45
        $region66: #{tpu_custom_call.1} parent=63 // pred_check_branch
          %386 = sbr.rel (%p384) target = $region68
        $region67: #{tpu_custom_call.1} parent=63 // pred_region
          %s387 = sand.u32 %s35, 1
          %s388 = scalar_lea.sflag [#allocation3], %s387
          %s389 = sand.u32 %s35, 1
          %s390 = smul.addr %s389, 32
          %s391 = scalar_lea.vmem [#allocation2], %s390
          %393 = vsyncadd %s388, 0
          %s394 = smul.addr %s25, 8
          %s395 = smul.addr %s394, 4
          %s396 = scalar_lea.hbm %s0, %s395
          %s398 = sshll.u32 %s396, 4
          %s399 = int_to_ptr.hbm [resolvable:$true] %s398
          %s400 = sshll.u32 %s391, 4
          %s401 = int_to_ptr.vmem [resolvable:$true] %s400
          %403 = dma.hbm_to_vmem [thread:$0]  %s399, 512, %s401, %s388
        $region68: #{tpu_custom_call.1} parent=63 // pred_fallthru
          _
      $region64: #{tpu_custom_call.1} parent=5 // pred_fallthru
        _
      %p404 = scmp.le.s32.totalorder 1, %s25
      %p405 = scmp.lt.s32.totalorder %s25, 3
      %p406 = pnand %p404, %p405
      %p407 = pneg %p406
      // Predicated region
      $region69: #{tpu_custom_call.1} parent=5 // pred_check
        _
      $region70: #{tpu_custom_call.1} parent=5 // pred_check_branch
        %409 = sbr.rel (%p406) target = $region72
      $region71: #{tpu_custom_call.1} parent=5 // pred_region
        %s410 = ssub.s32 %s25, 1
        %s411 = sand.u32 %s38, 1
        %s412 = scalar_lea.sflag [#allocation3], %s411
        %s413 = sand.u32 %s38, 1
        %s414 = smul.addr %s413, 32
        %s415 = scalar_lea.vmem [#allocation2], %s414
        // Predicated region
        $region73: #{tpu_custom_call.1} parent=71 // pred_check
          %p416 = pneg %p51
        $region74: #{tpu_custom_call.1} parent=71 // pred_check_branch
          %418 = sbr.rel (%p416) target = $region76
        $region75: #{tpu_custom_call.1} parent=71 // pred_region
          %420 = dma.done %s412, 512
        $region76: #{tpu_custom_call.1} parent=71 // pred_fallthru
          _
        %s421 = sand.u32 %s38, 1
        %s422 = scalar_lea.sflag [#allocation3], %s421
        %s423 = sand.u32 %s38, 1
        %s424 = smul.addr %s423, 32
        %s425 = scalar_lea.vmem [#allocation2], %s424
        %p426 = pneg %p51
        %p427 = pneg %p48
        %p428 = pneg %p72
        %p429 = pneg %p69
        %p430 = pneg %p93
        %p431 = pneg %p90
        %p432 = pneg %p114
        %p433 = pneg %p111
        %p434 = pneg %p135
        %p435 = pneg %p132
        %p436 = pneg %p156
        %p437 = pneg %p153
        %p438 = pneg %p177
        %p439 = pneg %p174
        %p440 = pneg %p198
        %p441 = pneg %p195
        %p442 = pneg %p219
        %p443 = pneg %p216
        %p444 = pneg %p240
        %p445 = pneg %p237
        %p446 = pneg %p261
        %p447 = pneg %p258
        %p448 = pneg %p282
        %p449 = pneg %p279
        %p450 = pneg %p303
        %p451 = pneg %p300
        %p452 = pneg %p329
        %p453 = pneg %p326
        %s454 = sand.u32 %s316, 1
        %s455 = scalar_lea.sflag [#allocation4], %s454
        %s456 = sand.u32 %s316, 1
        %s457 = smul.addr %s456, 8
        %s458 = scalar_lea.vmem [#allocation5], %s457
        %v459 = vld [vmem:[%s415] sm:$0xff]
        %v460 = vld [vmem:[%s415 + $0x8] sm:$0xff]
        %v461 = vld [vmem:[%s415 + $0x10] sm:$0xff]
        %v462 = vld [vmem:[%s415 + $0x18] sm:$0xff]
        %v463 = vld [vmem:[%s1] sm:$0x1f]
        %v464 = vld [vmem:[%s2] sm:$0x1f]
        %466 = vset.pattern.permute.xlu0 0
        %467 = vperm.xlu0 %466, %v464
        %v468 = vpop.permute.xlu0 %467
        %474 = vst [vmem:[#allocation1] ss:$2 sm:$0xff] %v459
        %s475 = scalar_lea.vmem [#allocation1], 16
        %476 = vst [vmem:[%s475] ss:$2 sm:$0xff] %v460
        %s477 = scalar_lea.vmem [#allocation1], 32
        %478 = vst [vmem:[%s477] ss:$2 sm:$0xff] %v461
        %s479 = scalar_lea.vmem [#allocation1], 48
        %480 = vst [vmem:[%s479] ss:$2 sm:$0xff] %v462
        %v481 = vld.sshfl [vmem:[#allocation1] sm:$0xff pattern:$0x75316420]
        %v482 = vld.sshfl [vmem:[#allocation1 + $0x8] sm:$0xff pattern:$0x75316420]
        %v483 = vld.sshfl [vmem:[#allocation1 + $0x10] sm:$0xff pattern:$0x75316420]
        %v484 = vld.sshfl [vmem:[#allocation1 + $0x18] sm:$0xff pattern:$0x75316420]
        %v485 = vld.sshfl [vmem:[#allocation1 + $0x20] sm:$0xff pattern:$0x75316420]
        %v486 = vld.sshfl [vmem:[#allocation1 + $0x28] sm:$0xff pattern:$0x75316420]
        %v487 = vld.sshfl [vmem:[#allocation1 + $0x30] sm:$0xff pattern:$0x75316420]
        %v488 = vld.sshfl [vmem:[#allocation1 + $0x38] sm:$0xff pattern:$0x75316420]
        %vm489 = vcmask 31744
        %v491 = vsel %vm489, %v463, 0
        %vm493 = vcmask 1043456
        %v494 = vsel %vm493, %v481, 0
        %v496 = vsel %vm493, %v482, 0
        %v498 = vsel %vm493, %v483, 0
        %v500 = vsel %vm493, %v484, 0
        %v502 = vsel %vm493, %v485, 0
        %v504 = vsel %vm493, %v486, 0
        %v506 = vsel %vm493, %v487, 0
        %v508 = vsel %vm493, %v488, 0
        %510 = vmatpush.msra.mxu0 0.0
        %511 = vmatpush.msra.mxu0 0.0
        %512 = vmatpush.msra.mxu0 0.0
        %513 = vmatpush.msra.mxu0 0.0
        %514 = vmatpush.msra.mxu0 0.0
        %515 = vmatpush.msra.mxu0 0.0
        %516 = vmatpush.msra.mxu0 0.0
        %517 = vmatpush.msra.mxu0 0.0
        %518 = vmatpush.msra.mxu0 0.0
        %519 = vmatpush.msra.mxu0 0.0
        %520 = vmatpush.msra.mxu0 0.0
        %521 = vmatpush.msra.mxu0 0.0
        %522 = vmatpush.msra.mxu0 0.0
        %523 = vmatpush.msra.mxu0 0.0
        %524 = vmatpush.msra.mxu0 0.0
        %525 = vmatpush.msra.mxu0 %v494
        %526 = vmatmul.f32.gmra.mxu0 %v491
        %v527 = vpop.f32.mrf.mxu0
        %v528 = vadd.f32 %v468, %v527
        %529 = vdwg.mxu0
        %530 = vmatpush.msra.mxu0 0.0
        %531 = vmatpush.msra.mxu0 0.0
        %532 = vmatpush.msra.mxu0 0.0
        %533 = vmatpush.msra.mxu0 0.0
        %534 = vmatpush.msra.mxu0 0.0
        %535 = vmatpush.msra.mxu0 0.0
        %536 = vmatpush.msra.mxu0 0.0
        %537 = vmatpush.msra.mxu0 0.0
        %538 = vmatpush.msra.mxu0 0.0
        %539 = vmatpush.msra.mxu0 0.0
        %540 = vmatpush.msra.mxu0 0.0
        %541 = vmatpush.msra.mxu0 0.0
        %542 = vmatpush.msra.mxu0 0.0
        %543 = vmatpush.msra.mxu0 0.0
        %544 = vmatpush.msra.mxu0 0.0
        %545 = vmatpush.msra.mxu0 %v496
        %546 = vmatmul.f32.gmra.mxu0 %v491
        %v547 = vpop.f32.mrf.mxu0
        %v548 = vadd.f32 %v468, %v547
        %549 = vdwg.mxu0
        %550 = vmatpush.msra.mxu0 0.0
        %551 = vmatpush.msra.mxu0 0.0
        %552 = vmatpush.msra.mxu0 0.0
        %553 = vmatpush.msra.mxu0 0.0
        %554 = vmatpush.msra.mxu0 0.0
        %555 = vmatpush.msra.mxu0 0.0
        %556 = vmatpush.msra.mxu0 0.0
        %557 = vmatpush.msra.mxu0 0.0
        %558 = vmatpush.msra.mxu0 0.0
        %559 = vmatpush.msra.mxu0 0.0
        %560 = vmatpush.msra.mxu0 0.0
        %561 = vmatpush.msra.mxu0 0.0
        %562 = vmatpush.msra.mxu0 0.0
        %563 = vmatpush.msra.mxu0 0.0
        %564 = vmatpush.msra.mxu0 0.0
        %565 = vmatpush.msra.mxu0 %v498
        %566 = vmatmul.f32.gmra.mxu0 %v491
        %v567 = vpop.f32.mrf.mxu0
        %v568 = vadd.f32 %v468, %v567
        %569 = vdwg.mxu0
        %570 = vmatpush.msra.mxu0 0.0
        %571 = vmatpush.msra.mxu0 0.0
        %572 = vmatpush.msra.mxu0 0.0
        %573 = vmatpush.msra.mxu0 0.0
        %574 = vmatpush.msra.mxu0 0.0
        %575 = vmatpush.msra.mxu0 0.0
        %576 = vmatpush.msra.mxu0 0.0
        %577 = vmatpush.msra.mxu0 0.0
        %578 = vmatpush.msra.mxu0 0.0
        %579 = vmatpush.msra.mxu0 0.0
        %580 = vmatpush.msra.mxu0 0.0
        %581 = vmatpush.msra.mxu0 0.0
        %582 = vmatpush.msra.mxu0 0.0
        %583 = vmatpush.msra.mxu0 0.0
        %584 = vmatpush.msra.mxu0 0.0
        %585 = vmatpush.msra.mxu0 %v500
        %586 = vmatmul.f32.gmra.mxu0 %v491
        %v587 = vpop.f32.mrf.mxu0
        %v588 = vadd.f32 %v468, %v587
        %589 = vdwg.mxu0
        %590 = vmatpush.msra.mxu0 0.0
        %591 = vmatpush.msra.mxu0 0.0
        %592 = vmatpush.msra.mxu0 0.0
        %593 = vmatpush.msra.mxu0 0.0
        %594 = vmatpush.msra.mxu0 0.0
        %595 = vmatpush.msra.mxu0 0.0
        %596 = vmatpush.msra.mxu0 0.0
        %597 = vmatpush.msra.mxu0 0.0
        %598 = vmatpush.msra.mxu0 0.0
        %599 = vmatpush.msra.mxu0 0.0
        %600 = vmatpush.msra.mxu0 0.0
        %601 = vmatpush.msra.mxu0 0.0
        %602 = vmatpush.msra.mxu0 0.0
        %603 = vmatpush.msra.mxu0 0.0
        %604 = vmatpush.msra.mxu0 0.0
        %605 = vmatpush.msra.mxu0 %v502
        %606 = vmatmul.f32.gmra.mxu0 %v491
        %v607 = vpop.f32.mrf.mxu0
        %v608 = vadd.f32 %v468, %v607
        %609 = vdwg.mxu0
        %610 = vmatpush.msra.mxu0 0.0
        %611 = vmatpush.msra.mxu0 0.0
        %612 = vmatpush.msra.mxu0 0.0
        %613 = vmatpush.msra.mxu0 0.0
        %614 = vmatpush.msra.mxu0 0.0
        %615 = vmatpush.msra.mxu0 0.0
        %616 = vmatpush.msra.mxu0 0.0
        %617 = vmatpush.msra.mxu0 0.0
        %618 = vmatpush.msra.mxu0 0.0
        %619 = vmatpush.msra.mxu0 0.0
        %620 = vmatpush.msra.mxu0 0.0
        %621 = vmatpush.msra.mxu0 0.0
        %622 = vmatpush.msra.mxu0 0.0
        %623 = vmatpush.msra.mxu0 0.0
        %624 = vmatpush.msra.mxu0 0.0
        %625 = vmatpush.msra.mxu0 %v504
        %626 = vmatmul.f32.gmra.mxu0 %v491
        %v627 = vpop.f32.mrf.mxu0
        %v628 = vadd.f32 %v468, %v627
        %629 = vdwg.mxu0
        %630 = vmatpush.msra.mxu0 0.0
        %631 = vmatpush.msra.mxu0 0.0
        %632 = vmatpush.msra.mxu0 0.0
        %633 = vmatpush.msra.mxu0 0.0
        %634 = vmatpush.msra.mxu0 0.0
        %635 = vmatpush.msra.mxu0 0.0
        %636 = vmatpush.msra.mxu0 0.0
        %637 = vmatpush.msra.mxu0 0.0
        %638 = vmatpush.msra.mxu0 0.0
        %639 = vmatpush.msra.mxu0 0.0
        %640 = vmatpush.msra.mxu0 0.0
        %641 = vmatpush.msra.mxu0 0.0
        %642 = vmatpush.msra.mxu0 0.0
        %643 = vmatpush.msra.mxu0 0.0
        %644 = vmatpush.msra.mxu0 0.0
        %645 = vmatpush.msra.mxu0 %v506
        %646 = vmatmul.f32.gmra.mxu0 %v491
        %v647 = vpop.f32.mrf.mxu0
        %v648 = vadd.f32 %v468, %v647
        %649 = vdwg.mxu0
        %650 = vmatpush.msra.mxu0 0.0
        %651 = vmatpush.msra.mxu0 0.0
        %652 = vmatpush.msra.mxu0 0.0
        %653 = vmatpush.msra.mxu0 0.0
        %654 = vmatpush.msra.mxu0 0.0
        %655 = vmatpush.msra.mxu0 0.0
        %656 = vmatpush.msra.mxu0 0.0
        %657 = vmatpush.msra.mxu0 0.0
        %658 = vmatpush.msra.mxu0 0.0
        %659 = vmatpush.msra.mxu0 0.0
        %660 = vmatpush.msra.mxu0 0.0
        %661 = vmatpush.msra.mxu0 0.0
        %662 = vmatpush.msra.mxu0 0.0
        %663 = vmatpush.msra.mxu0 0.0
        %664 = vmatpush.msra.mxu0 0.0
        %665 = vmatpush.msra.mxu0 %v508
        %666 = vmatmul.f32.gmra.mxu0 %v491
        %v667 = vpop.f32.mrf.mxu0
        %v668 = vadd.f32 %v468, %v667
        %669 = vdwg.mxu0
        %v670 = vld [vmem:[%s3] sm:$0xf]
        %v671 = vld [vmem:[%s4] sm:$0xf]
        %673 = vset.pattern.permute.xlu0 0
        %674 = vperm.xlu0 %673, %v671
        %v675 = vpop.permute.xlu0 %674
        %677 = vst [vmem:[#allocation1] ss:$2 sm:$0xff] %v459
        %s678 = scalar_lea.vmem [#allocation1], 16
        %679 = vst [vmem:[%s678] ss:$2 sm:$0xff] %v460
        %s680 = scalar_lea.vmem [#allocation1], 32
        %681 = vst [vmem:[%s680] ss:$2 sm:$0xff] %v461
        %s682 = scalar_lea.vmem [#allocation1], 48
        %683 = vst [vmem:[%s682] ss:$2 sm:$0xff] %v462
        %v684 = vld.sshfl [vmem:[#allocation1] sm:$0xff pattern:$0x75316420]
        %v685 = vld.sshfl [vmem:[#allocation1 + $0x8] sm:$0xff pattern:$0x75316420]
        %v686 = vld.sshfl [vmem:[#allocation1 + $0x10] sm:$0xff pattern:$0x75316420]
        %v687 = vld.sshfl [vmem:[#allocation1 + $0x18] sm:$0xff pattern:$0x75316420]
        %v688 = vld.sshfl [vmem:[#allocation1 + $0x20] sm:$0xff pattern:$0x75316420]
        %v689 = vld.sshfl [vmem:[#allocation1 + $0x28] sm:$0xff pattern:$0x75316420]
        %v690 = vld.sshfl [vmem:[#allocation1 + $0x30] sm:$0xff pattern:$0x75316420]
        %v691 = vld.sshfl [vmem:[#allocation1 + $0x38] sm:$0xff pattern:$0x75316420]
        %v693 = vsel %vm489, %v670, 0
        %v695 = vsel %vm493, %v684, 0
        %v697 = vsel %vm493, %v685, 0
        %v699 = vsel %vm493, %v686, 0
        %v701 = vsel %vm493, %v687, 0
        %v703 = vsel %vm493, %v688, 0
        %v705 = vsel %vm493, %v689, 0
        %v707 = vsel %vm493, %v690, 0
        %v709 = vsel %vm493, %v691, 0
        %711 = vmatpush.msra.mxu0 0.0
        %712 = vmatpush.msra.mxu0 0.0
        %713 = vmatpush.msra.mxu0 0.0
        %714 = vmatpush.msra.mxu0 0.0
        %715 = vmatpush.msra.mxu0 0.0
        %716 = vmatpush.msra.mxu0 0.0
        %717 = vmatpush.msra.mxu0 0.0
        %718 = vmatpush.msra.mxu0 0.0
        %719 = vmatpush.msra.mxu0 0.0
        %720 = vmatpush.msra.mxu0 0.0
        %721 = vmatpush.msra.mxu0 0.0
        %722 = vmatpush.msra.mxu0 0.0
        %723 = vmatpush.msra.mxu0 0.0
        %724 = vmatpush.msra.mxu0 0.0
        %725 = vmatpush.msra.mxu0 0.0
        %726 = vmatpush.msra.mxu0 %v695
        %727 = vmatmul.f32.gmra.mxu0 %v693
        %v728 = vpop.f32.mrf.mxu0
        %v729 = vadd.f32 %v675, %v728
        %730 = vdwg.mxu0
        %731 = vmatpush.msra.mxu0 0.0
        %732 = vmatpush.msra.mxu0 0.0
        %733 = vmatpush.msra.mxu0 0.0
        %734 = vmatpush.msra.mxu0 0.0
        %735 = vmatpush.msra.mxu0 0.0
        %736 = vmatpush.msra.mxu0 0.0
        %737 = vmatpush.msra.mxu0 0.0
        %738 = vmatpush.msra.mxu0 0.0
        %739 = vmatpush.msra.mxu0 0.0
        %740 = vmatpush.msra.mxu0 0.0
        %741 = vmatpush.msra.mxu0 0.0
        %742 = vmatpush.msra.mxu0 0.0
        %743 = vmatpush.msra.mxu0 0.0
        %744 = vmatpush.msra.mxu0 0.0
        %745 = vmatpush.msra.mxu0 0.0
        %746 = vmatpush.msra.mxu0 %v697
        %747 = vmatmul.f32.gmra.mxu0 %v693
        %v748 = vpop.f32.mrf.mxu0
        %v749 = vadd.f32 %v675, %v748
        %750 = vdwg.mxu0
        %751 = vmatpush.msra.mxu0 0.0
        %752 = vmatpush.msra.mxu0 0.0
        %753 = vmatpush.msra.mxu0 0.0
        %754 = vmatpush.msra.mxu0 0.0
        %755 = vmatpush.msra.mxu0 0.0
        %756 = vmatpush.msra.mxu0 0.0
        %757 = vmatpush.msra.mxu0 0.0
        %758 = vmatpush.msra.mxu0 0.0
        %759 = vmatpush.msra.mxu0 0.0
        %760 = vmatpush.msra.mxu0 0.0
        %761 = vmatpush.msra.mxu0 0.0
        %762 = vmatpush.msra.mxu0 0.0
        %763 = vmatpush.msra.mxu0 0.0
        %764 = vmatpush.msra.mxu0 0.0
        %765 = vmatpush.msra.mxu0 0.0
        %766 = vmatpush.msra.mxu0 %v699
        %767 = vmatmul.f32.gmra.mxu0 %v693
        %v768 = vpop.f32.mrf.mxu0
        %v769 = vadd.f32 %v675, %v768
        %770 = vdwg.mxu0
        %771 = vmatpush.msra.mxu0 0.0
        %772 = vmatpush.msra.mxu0 0.0
        %773 = vmatpush.msra.mxu0 0.0
        %774 = vmatpush.msra.mxu0 0.0
        %775 = vmatpush.msra.mxu0 0.0
        %776 = vmatpush.msra.mxu0 0.0
        %777 = vmatpush.msra.mxu0 0.0
        %778 = vmatpush.msra.mxu0 0.0
        %779 = vmatpush.msra.mxu0 0.0
        %780 = vmatpush.msra.mxu0 0.0
        %781 = vmatpush.msra.mxu0 0.0
        %782 = vmatpush.msra.mxu0 0.0
        %783 = vmatpush.msra.mxu0 0.0
        %784 = vmatpush.msra.mxu0 0.0
        %785 = vmatpush.msra.mxu0 0.0
        %786 = vmatpush.msra.mxu0 %v701
        %787 = vmatmul.f32.gmra.mxu0 %v693
        %v788 = vpop.f32.mrf.mxu0
        %v789 = vadd.f32 %v675, %v788
        %790 = vdwg.mxu0
        %791 = vmatpush.msra.mxu0 0.0
        %792 = vmatpush.msra.mxu0 0.0
        %793 = vmatpush.msra.mxu0 0.0
        %794 = vmatpush.msra.mxu0 0.0
        %795 = vmatpush.msra.mxu0 0.0
        %796 = vmatpush.msra.mxu0 0.0
        %797 = vmatpush.msra.mxu0 0.0
        %798 = vmatpush.msra.mxu0 0.0
        %799 = vmatpush.msra.mxu0 0.0
        %800 = vmatpush.msra.mxu0 0.0
        %801 = vmatpush.msra.mxu0 0.0
        %802 = vmatpush.msra.mxu0 0.0
        %803 = vmatpush.msra.mxu0 0.0
        %804 = vmatpush.msra.mxu0 0.0
        %805 = vmatpush.msra.mxu0 0.0
        %806 = vmatpush.msra.mxu0 %v703
        %807 = vmatmul.f32.gmra.mxu0 %v693
        %v808 = vpop.f32.mrf.mxu0
        %v809 = vadd.f32 %v675, %v808
        %810 = vdwg.mxu0
        %811 = vmatpush.msra.mxu0 0.0
        %812 = vmatpush.msra.mxu0 0.0
        %813 = vmatpush.msra.mxu0 0.0
        %814 = vmatpush.msra.mxu0 0.0
        %815 = vmatpush.msra.mxu0 0.0
        %816 = vmatpush.msra.mxu0 0.0
        %817 = vmatpush.msra.mxu0 0.0
        %818 = vmatpush.msra.mxu0 0.0
        %819 = vmatpush.msra.mxu0 0.0
        %820 = vmatpush.msra.mxu0 0.0
        %821 = vmatpush.msra.mxu0 0.0
        %822 = vmatpush.msra.mxu0 0.0
        %823 = vmatpush.msra.mxu0 0.0
        %824 = vmatpush.msra.mxu0 0.0
        %825 = vmatpush.msra.mxu0 0.0
        %826 = vmatpush.msra.mxu0 %v705
        %827 = vmatmul.f32.gmra.mxu0 %v693
        %v828 = vpop.f32.mrf.mxu0
        %v829 = vadd.f32 %v675, %v828
        %830 = vdwg.mxu0
        %831 = vmatpush.msra.mxu0 0.0
        %832 = vmatpush.msra.mxu0 0.0
        %833 = vmatpush.msra.mxu0 0.0
        %834 = vmatpush.msra.mxu0 0.0
        %835 = vmatpush.msra.mxu0 0.0
        %836 = vmatpush.msra.mxu0 0.0
        %837 = vmatpush.msra.mxu0 0.0
        %838 = vmatpush.msra.mxu0 0.0
        %839 = vmatpush.msra.mxu0 0.0
        %840 = vmatpush.msra.mxu0 0.0
        %841 = vmatpush.msra.mxu0 0.0
        %842 = vmatpush.msra.mxu0 0.0
        %843 = vmatpush.msra.mxu0 0.0
        %844 = vmatpush.msra.mxu0 0.0
        %845 = vmatpush.msra.mxu0 0.0
        %846 = vmatpush.msra.mxu0 %v707
        %847 = vmatmul.f32.gmra.mxu0 %v693
        %v848 = vpop.f32.mrf.mxu0
        %v849 = vadd.f32 %v675, %v848
        %850 = vdwg.mxu0
        %851 = vmatpush.msra.mxu0 0.0
        %852 = vmatpush.msra.mxu0 0.0
        %853 = vmatpush.msra.mxu0 0.0
        %854 = vmatpush.msra.mxu0 0.0
        %855 = vmatpush.msra.mxu0 0.0
        %856 = vmatpush.msra.mxu0 0.0
        %857 = vmatpush.msra.mxu0 0.0
        %858 = vmatpush.msra.mxu0 0.0
        %859 = vmatpush.msra.mxu0 0.0
        %860 = vmatpush.msra.mxu0 0.0
        %861 = vmatpush.msra.mxu0 0.0
        %862 = vmatpush.msra.mxu0 0.0
        %863 = vmatpush.msra.mxu0 0.0
        %864 = vmatpush.msra.mxu0 0.0
        %865 = vmatpush.msra.mxu0 0.0
        %866 = vmatpush.msra.mxu0 %v709
        %867 = vmatmul.f32.gmra.mxu0 %v693
        %v868 = vpop.f32.mrf.mxu0
        %v869 = vadd.f32 %v675, %v868
        %870 = vdwg.mxu0
        %v871 = vld [vmem:[%s11] sm:$0xf]
        %872 = vmatpush.xpose.msra.mxu0 0.0
        %873 = vmatpush.xpose.msra.mxu0 0.0
        %874 = vmatpush.xpose.msra.mxu0 0.0
        %875 = vmatpush.xpose.msra.mxu0 0.0
        %876 = vmatpush.xpose.msra.mxu0 0.0
        %877 = vmatpush.xpose.msra.mxu0 0.0
        %878 = vmatpush.xpose.msra.mxu0 0.0
        %879 = vmatpush.xpose.msra.mxu0 0.0
        %880 = vmatpush.xpose.msra.mxu0 0.0
        %881 = vmatpush.xpose.msra.mxu0 0.0
        %882 = vmatpush.xpose.msra.mxu0 0.0
        %883 = vmatpush.xpose.msra.mxu0 0.0
        %884 = vmatpush.xpose.msra.mxu0 0.0
        %885 = vmatpush.xpose.msra.mxu0 0.0
        %886 = vmatpush.xpose.msra.mxu0 0.0
        %887 = vmatpush.xpose.msra.mxu0 %v729
        %888 = vmatmul.f32.gmra.mxu0 %v528
        %v889 = vpop.f32.mrf.mxu0
        %v890 = vadd.f32 0.0, %v889
        %891 = vdwg.mxu0
        %892 = vmatpush.xpose.msra.mxu0 0.0
        %893 = vmatpush.xpose.msra.mxu0 0.0
        %894 = vmatpush.xpose.msra.mxu0 0.0
        %895 = vmatpush.xpose.msra.mxu0 0.0
        %896 = vmatpush.xpose.msra.mxu0 0.0
        %897 = vmatpush.xpose.msra.mxu0 0.0
        %898 = vmatpush.xpose.msra.mxu0 0.0
        %899 = vmatpush.xpose.msra.mxu0 0.0
        %900 = vmatpush.xpose.msra.mxu0 0.0
        %901 = vmatpush.xpose.msra.mxu0 0.0
        %902 = vmatpush.xpose.msra.mxu0 0.0
        %903 = vmatpush.xpose.msra.mxu0 0.0
        %904 = vmatpush.xpose.msra.mxu0 0.0
        %905 = vmatpush.xpose.msra.mxu0 0.0
        %906 = vmatpush.xpose.msra.mxu0 0.0
        %907 = vmatpush.xpose.msra.mxu0 %v749
        %908 = vmatmul.f32.gmra.mxu0 %v548
        %v909 = vpop.f32.mrf.mxu0
        %v910 = vadd.f32 %v890, %v909
        %911 = vdwg.mxu0
        %v912 = vld [vmem:[%s5] sm:$0x1f]
        %v913 = vld [vmem:[%s6] sm:$0x1f]
        %915 = vset.pattern.permute.xlu0 0
        %916 = vperm.xlu0 %915, %v913
        %v917 = vpop.permute.xlu0 %916
        %vm919 = vcmask 39936
        %v921 = vsel %vm919, %v912, 0
        %vm923 = vcmask 1044480
        %v925 = vsel %vm923, %v910, 0
        %927 = vmatpush.msra.mxu0 0.0
        %928 = vmatpush.msra.mxu0 0.0
        %929 = vmatpush.msra.mxu0 0.0
        %930 = vmatpush.msra.mxu0 0.0
        %931 = vmatpush.msra.mxu0 0.0
        %932 = vmatpush.msra.mxu0 0.0
        %933 = vmatpush.msra.mxu0 0.0
        %934 = vmatpush.msra.mxu0 0.0
        %935 = vmatpush.msra.mxu0 0.0
        %936 = vmatpush.msra.mxu0 0.0
        %937 = vmatpush.msra.mxu0 0.0
        %938 = vmatpush.msra.mxu0 0.0
        %939 = vmatpush.msra.mxu0 0.0
        %940 = vmatpush.msra.mxu0 0.0
        %941 = vmatpush.msra.mxu0 0.0
        %942 = vmatpush.msra.mxu0 %v925
        %943 = vmatmul.f32.gmra.mxu0 %v921
        %v944 = vpop.f32.mrf.mxu0
        %v945 = vadd.f32 %v917, %v944
        %946 = vdwg.mxu0
        %v947 = vld [vmem:[%s7] sm:$0xf]
        %v948 = vld [vmem:[%s8] sm:$0xf]
        %950 = vset.pattern.permute.xlu0 0
        %951 = vperm.xlu0 %950, %v948
        %v952 = vpop.permute.xlu0 %951
        %v955 = vsel %vm489, %v947, 0
        %v958 = vsel %vm489, %v945, 0
        %960 = vmatpush.xpose.msra.mxu0 0.0
        %961 = vmatpush.xpose.msra.mxu0 0.0
        %962 = vmatpush.xpose.msra.mxu0 0.0
        %963 = vmatpush.xpose.msra.mxu0 0.0
        %964 = vmatpush.xpose.msra.mxu0 0.0
        %965 = vmatpush.xpose.msra.mxu0 0.0
        %966 = vmatpush.xpose.msra.mxu0 0.0
        %967 = vmatpush.xpose.msra.mxu0 0.0
        %968 = vmatpush.xpose.msra.mxu0 0.0
        %969 = vmatpush.xpose.msra.mxu0 0.0
        %970 = vmatpush.xpose.msra.mxu0 0.0
        %971 = vmatpush.xpose.msra.mxu0 0.0
        %972 = vmatpush.xpose.msra.mxu0 0.0
        %973 = vmatpush.xpose.msra.mxu0 0.0
        %974 = vmatpush.xpose.msra.mxu0 0.0
        %975 = vmatpush.xpose.msra.mxu0 %v958
        %976 = vmatmul.f32.gmra.mxu0 %v955
        %v977 = vpop.f32.mrf.mxu0
        %v978 = vadd.f32 %v952, %v977
        %979 = vdwg.mxu0
        %v981 = vsel %vm919, %v978, 0
        %v984 = vsel %vm923, %v528, 0
        %v987 = vsel %vm923, %v548, 0
        %989 = vmatpush.msra.mxu0 0.0
        %990 = vmatpush.msra.mxu0 0.0
        %991 = vmatpush.msra.mxu0 0.0
        %992 = vmatpush.msra.mxu0 0.0
        %993 = vmatpush.msra.mxu0 0.0
        %994 = vmatpush.msra.mxu0 0.0
        %995 = vmatpush.msra.mxu0 0.0
        %996 = vmatpush.msra.mxu0 0.0
        %997 = vmatpush.msra.mxu0 0.0
        %998 = vmatpush.msra.mxu0 0.0
        %999 = vmatpush.msra.mxu0 0.0
        %1000 = vmatpush.msra.mxu0 0.0
        %1001 = vmatpush.msra.mxu0 0.0
        %1002 = vmatpush.msra.mxu0 0.0
        %1003 = vmatpush.msra.mxu0 0.0
        %1004 = vmatpush.msra.mxu0 %v984
        %1005 = vmatmul.f32.gmra.mxu0 %v981
        %v1006 = vpop.f32.mrf.mxu0
        %v1007 = vadd.f32 0.0, %v1006
        %1008 = vdwg.mxu0
        %1009 = vmatpush.msra.mxu0 0.0
        %1010 = vmatpush.msra.mxu0 0.0
        %1011 = vmatpush.msra.mxu0 0.0
        %1012 = vmatpush.msra.mxu0 0.0
        %1013 = vmatpush.msra.mxu0 0.0
        %1014 = vmatpush.msra.mxu0 0.0
        %1015 = vmatpush.msra.mxu0 0.0
        %1016 = vmatpush.msra.mxu0 0.0
        %1017 = vmatpush.msra.mxu0 0.0
        %1018 = vmatpush.msra.mxu0 0.0
        %1019 = vmatpush.msra.mxu0 0.0
        %1020 = vmatpush.msra.mxu0 0.0
        %1021 = vmatpush.msra.mxu0 0.0
        %1022 = vmatpush.msra.mxu0 0.0
        %1023 = vmatpush.msra.mxu0 0.0
        %1024 = vmatpush.msra.mxu0 %v987
        %1025 = vmatmul.f32.gmra.mxu0 %v981
        %v1026 = vpop.f32.mrf.mxu0
        %v1027 = vadd.f32 0.0, %v1026
        %1028 = vdwg.mxu0
        %v1029 = vld [vmem:[%s9] sm:$0xf]
        %v1030 = vld [vmem:[%s10] sm:$0xf]
        %1032 = vset.pattern.permute.xlu0 0
        %1033 = vperm.xlu0 %1032, %v1030
        %v1034 = vpop.permute.xlu0 %1033
        %v1037 = vsel %vm489, %v1029, 0
        %v1040 = vsel %vm493, %v1007, 0
        %v1043 = vsel %vm493, %v1027, 0
        %1045 = vmatpush.msra.mxu0 0.0
        %1046 = vmatpush.msra.mxu0 0.0
        %1047 = vmatpush.msra.mxu0 0.0
        %1048 = vmatpush.msra.mxu0 0.0
        %1049 = vmatpush.msra.mxu0 0.0
        %1050 = vmatpush.msra.mxu0 0.0
        %1051 = vmatpush.msra.mxu0 0.0
        %1052 = vmatpush.msra.mxu0 0.0
        %1053 = vmatpush.msra.mxu0 0.0
        %1054 = vmatpush.msra.mxu0 0.0
        %1055 = vmatpush.msra.mxu0 0.0
        %1056 = vmatpush.msra.mxu0 0.0
        %1057 = vmatpush.msra.mxu0 0.0
        %1058 = vmatpush.msra.mxu0 0.0
        %1059 = vmatpush.msra.mxu0 0.0
        %1060 = vmatpush.msra.mxu0 %v1040
        %1061 = vmatmul.f32.gmra.mxu0 %v1037
        %v1062 = vpop.f32.mrf.mxu0
        %v1063 = vadd.f32 %v1034, %v1062
        %1064 = vdwg.mxu0
        %1065 = vmatpush.msra.mxu0 0.0
        %1066 = vmatpush.msra.mxu0 0.0
        %1067 = vmatpush.msra.mxu0 0.0
        %1068 = vmatpush.msra.mxu0 0.0
        %1069 = vmatpush.msra.mxu0 0.0
        %1070 = vmatpush.msra.mxu0 0.0
        %1071 = vmatpush.msra.mxu0 0.0
        %1072 = vmatpush.msra.mxu0 0.0
        %1073 = vmatpush.msra.mxu0 0.0
        %1074 = vmatpush.msra.mxu0 0.0
        %1075 = vmatpush.msra.mxu0 0.0
        %1076 = vmatpush.msra.mxu0 0.0
        %1077 = vmatpush.msra.mxu0 0.0
        %1078 = vmatpush.msra.mxu0 0.0
        %1079 = vmatpush.msra.mxu0 0.0
        %1080 = vmatpush.msra.mxu0 %v1043
        %1081 = vmatmul.f32.gmra.mxu0 %v1037
        %v1082 = vpop.f32.mrf.mxu0
        %v1083 = vadd.f32 %v1034, %v1082
        %1084 = vdwg.mxu0
        %v1087 = vrot.slane %v1083, 4
        %v1088 = vsel %vm493, %v1063, %v1087
        %v1090 = vadd.f32 %v459, %v1088
        %1091 = vmatpush.xpose.msra.mxu0 0.0
        %1092 = vmatpush.xpose.msra.mxu0 0.0
        %1093 = vmatpush.xpose.msra.mxu0 0.0
        %1094 = vmatpush.xpose.msra.mxu0 0.0
        %1095 = vmatpush.xpose.msra.mxu0 0.0
        %1096 = vmatpush.xpose.msra.mxu0 0.0
        %1097 = vmatpush.xpose.msra.mxu0 0.0
        %1098 = vmatpush.xpose.msra.mxu0 0.0
        %1099 = vmatpush.xpose.msra.mxu0 0.0
        %1100 = vmatpush.xpose.msra.mxu0 0.0
        %1101 = vmatpush.xpose.msra.mxu0 0.0
        %1102 = vmatpush.xpose.msra.mxu0 0.0
        %1103 = vmatpush.xpose.msra.mxu0 0.0
        %1104 = vmatpush.xpose.msra.mxu0 0.0
        %1105 = vmatpush.xpose.msra.mxu0 0.0
        %1106 = vmatpush.xpose.msra.mxu0 %v769
        %1107 = vmatmul.f32.gmra.mxu0 %v568
        %v1108 = vpop.f32.mrf.mxu0
        %v1109 = vadd.f32 0.0, %v1108
        %1110 = vdwg.mxu0
        %1111 = vmatpush.xpose.msra.mxu0 0.0
        %1112 = vmatpush.xpose.msra.mxu0 0.0
        %1113 = vmatpush.xpose.msra.mxu0 0.0
        %1114 = vmatpush.xpose.msra.mxu0 0.0
        %1115 = vmatpush.xpose.msra.mxu0 0.0
        %1116 = vmatpush.xpose.msra.mxu0 0.0
        %1117 = vmatpush.xpose.msra.mxu0 0.0
        %1118 = vmatpush.xpose.msra.mxu0 0.0
        %1119 = vmatpush.xpose.msra.mxu0 0.0
        %1120 = vmatpush.xpose.msra.mxu0 0.0
        %1121 = vmatpush.xpose.msra.mxu0 0.0
        %1122 = vmatpush.xpose.msra.mxu0 0.0
        %1123 = vmatpush.xpose.msra.mxu0 0.0
        %1124 = vmatpush.xpose.msra.mxu0 0.0
        %1125 = vmatpush.xpose.msra.mxu0 0.0
        %1126 = vmatpush.xpose.msra.mxu0 %v789
        %1127 = vmatmul.f32.gmra.mxu0 %v588
        %v1128 = vpop.f32.mrf.mxu0
        %v1129 = vadd.f32 %v1109, %v1128
        %1130 = vdwg.mxu0
        %v1132 = vsel %vm923, %v1129, 0
        %1134 = vmatpush.msra.mxu0 0.0
        %1135 = vmatpush.msra.mxu0 0.0
        %1136 = vmatpush.msra.mxu0 0.0
        %1137 = vmatpush.msra.mxu0 0.0
        %1138 = vmatpush.msra.mxu0 0.0
        %1139 = vmatpush.msra.mxu0 0.0
        %1140 = vmatpush.msra.mxu0 0.0
        %1141 = vmatpush.msra.mxu0 0.0
        %1142 = vmatpush.msra.mxu0 0.0
        %1143 = vmatpush.msra.mxu0 0.0
        %1144 = vmatpush.msra.mxu0 0.0
        %1145 = vmatpush.msra.mxu0 0.0
        %1146 = vmatpush.msra.mxu0 0.0
        %1147 = vmatpush.msra.mxu0 0.0
        %1148 = vmatpush.msra.mxu0 0.0
        %1149 = vmatpush.msra.mxu0 %v1132
        %1150 = vmatmul.f32.gmra.mxu0 %v921
        %v1151 = vpop.f32.mrf.mxu0
        %v1152 = vadd.f32 %v917, %v1151
        %1153 = vdwg.mxu0
        %v1155 = vsel %vm489, %v1152, 0
        %1157 = vmatpush.xpose.msra.mxu0 0.0
        %1158 = vmatpush.xpose.msra.mxu0 0.0
        %1159 = vmatpush.xpose.msra.mxu0 0.0
        %1160 = vmatpush.xpose.msra.mxu0 0.0
        %1161 = vmatpush.xpose.msra.mxu0 0.0
        %1162 = vmatpush.xpose.msra.mxu0 0.0
        %1163 = vmatpush.xpose.msra.mxu0 0.0
        %1164 = vmatpush.xpose.msra.mxu0 0.0
        %1165 = vmatpush.xpose.msra.mxu0 0.0
        %1166 = vmatpush.xpose.msra.mxu0 0.0
        %1167 = vmatpush.xpose.msra.mxu0 0.0
        %1168 = vmatpush.xpose.msra.mxu0 0.0
        %1169 = vmatpush.xpose.msra.mxu0 0.0
        %1170 = vmatpush.xpose.msra.mxu0 0.0
        %1171 = vmatpush.xpose.msra.mxu0 0.0
        %1172 = vmatpush.xpose.msra.mxu0 %v1155
        %1173 = vmatmul.f32.gmra.mxu0 %v955
        %v1174 = vpop.f32.mrf.mxu0
        %v1175 = vadd.f32 %v952, %v1174
        %1176 = vdwg.mxu0
        %v1178 = vsel %vm919, %v1175, 0
        %v1181 = vsel %vm923, %v568, 0
        %v1184 = vsel %vm923, %v588, 0
        %1186 = vmatpush.msra.mxu0 0.0
        %1187 = vmatpush.msra.mxu0 0.0
        %1188 = vmatpush.msra.mxu0 0.0
        %1189 = vmatpush.msra.mxu0 0.0
        %1190 = vmatpush.msra.mxu0 0.0
        %1191 = vmatpush.msra.mxu0 0.0
        %1192 = vmatpush.msra.mxu0 0.0
        %1193 = vmatpush.msra.mxu0 0.0
        %1194 = vmatpush.msra.mxu0 0.0
        %1195 = vmatpush.msra.mxu0 0.0
        %1196 = vmatpush.msra.mxu0 0.0
        %1197 = vmatpush.msra.mxu0 0.0
        %1198 = vmatpush.msra.mxu0 0.0
        %1199 = vmatpush.msra.mxu0 0.0
        %1200 = vmatpush.msra.mxu0 0.0
        %1201 = vmatpush.msra.mxu0 %v1181
        %1202 = vmatmul.f32.gmra.mxu0 %v1178
        %v1203 = vpop.f32.mrf.mxu0
        %v1204 = vadd.f32 0.0, %v1203
        %1205 = vdwg.mxu0
        %1206 = vmatpush.msra.mxu0 0.0
        %1207 = vmatpush.msra.mxu0 0.0
        %1208 = vmatpush.msra.mxu0 0.0
        %1209 = vmatpush.msra.mxu0 0.0
        %1210 = vmatpush.msra.mxu0 0.0
        %1211 = vmatpush.msra.mxu0 0.0
        %1212 = vmatpush.msra.mxu0 0.0
        %1213 = vmatpush.msra.mxu0 0.0
        %1214 = vmatpush.msra.mxu0 0.0
        %1215 = vmatpush.msra.mxu0 0.0
        %1216 = vmatpush.msra.mxu0 0.0
        %1217 = vmatpush.msra.mxu0 0.0
        %1218 = vmatpush.msra.mxu0 0.0
        %1219 = vmatpush.msra.mxu0 0.0
        %1220 = vmatpush.msra.mxu0 0.0
        %1221 = vmatpush.msra.mxu0 %v1184
        %1222 = vmatmul.f32.gmra.mxu0 %v1178
        %v1223 = vpop.f32.mrf.mxu0
        %v1224 = vadd.f32 0.0, %v1223
        %1225 = vdwg.mxu0
        %v1227 = vsel %vm493, %v1204, 0
        %v1230 = vsel %vm493, %v1224, 0
        %1232 = vmatpush.msra.mxu0 0.0
        %1233 = vmatpush.msra.mxu0 0.0
        %1234 = vmatpush.msra.mxu0 0.0
        %1235 = vmatpush.msra.mxu0 0.0
        %1236 = vmatpush.msra.mxu0 0.0
        %1237 = vmatpush.msra.mxu0 0.0
        %1238 = vmatpush.msra.mxu0 0.0
        %1239 = vmatpush.msra.mxu0 0.0
        %1240 = vmatpush.msra.mxu0 0.0
        %1241 = vmatpush.msra.mxu0 0.0
        %1242 = vmatpush.msra.mxu0 0.0
        %1243 = vmatpush.msra.mxu0 0.0
        %1244 = vmatpush.msra.mxu0 0.0
        %1245 = vmatpush.msra.mxu0 0.0
        %1246 = vmatpush.msra.mxu0 0.0
        %1247 = vmatpush.msra.mxu0 %v1227
        %1248 = vmatmul.f32.gmra.mxu0 %v1037
        %v1249 = vpop.f32.mrf.mxu0
        %v1250 = vadd.f32 %v1034, %v1249
        %1251 = vdwg.mxu0
        %1252 = vmatpush.msra.mxu0 0.0
        %1253 = vmatpush.msra.mxu0 0.0
        %1254 = vmatpush.msra.mxu0 0.0
        %1255 = vmatpush.msra.mxu0 0.0
        %1256 = vmatpush.msra.mxu0 0.0
        %1257 = vmatpush.msra.mxu0 0.0
        %1258 = vmatpush.msra.mxu0 0.0
        %1259 = vmatpush.msra.mxu0 0.0
        %1260 = vmatpush.msra.mxu0 0.0
        %1261 = vmatpush.msra.mxu0 0.0
        %1262 = vmatpush.msra.mxu0 0.0
        %1263 = vmatpush.msra.mxu0 0.0
        %1264 = vmatpush.msra.mxu0 0.0
        %1265 = vmatpush.msra.mxu0 0.0
        %1266 = vmatpush.msra.mxu0 0.0
        %1267 = vmatpush.msra.mxu0 %v1230
        %1268 = vmatmul.f32.gmra.mxu0 %v1037
        %v1269 = vpop.f32.mrf.mxu0
        %v1270 = vadd.f32 %v1034, %v1269
        %1271 = vdwg.mxu0
        %v1274 = vrot.slane %v1270, 4
        %v1275 = vsel %vm493, %v1250, %v1274
        %v1277 = vadd.f32 %v460, %v1275
        %1279 = vrot.lane.b32.xlu0 %v871, 124
        %v1280 = vpop.permute.xlu0 %1279
        %1282 = vst [vmem:[#allocation1] ss:$2 sm:$0xff] %v1277
        %v1283 = vld.sshfl [vmem:[#allocation1] sm:$0xff pattern:$0x75316420]
        %v1284 = vld.sshfl [vmem:[#allocation1 + $0x8] sm:$0xff pattern:$0x75316420]
        %v1285 = vsel %vm489, %v1280, 0
        %v1287 = vsel %vm493, %v1283, 0
        %v1289 = vsel %vm493, %v1284, 0
        %1291 = vmatpush.msra.mxu0 0.0
        %1292 = vmatpush.msra.mxu0 0.0
        %1293 = vmatpush.msra.mxu0 0.0
        %1294 = vmatpush.msra.mxu0 0.0
        %1295 = vmatpush.msra.mxu0 0.0
        %1296 = vmatpush.msra.mxu0 0.0
        %1297 = vmatpush.msra.mxu0 0.0
        %1298 = vmatpush.msra.mxu0 0.0
        %1299 = vmatpush.msra.mxu0 0.0
        %1300 = vmatpush.msra.mxu0 0.0
        %1301 = vmatpush.msra.mxu0 0.0
        %1302 = vmatpush.msra.mxu0 0.0
        %1303 = vmatpush.msra.mxu0 0.0
        %1304 = vmatpush.msra.mxu0 0.0
        %1305 = vmatpush.msra.mxu0 0.0
        %1306 = vmatpush.msra.mxu0 %v1287
        %1307 = vmatmul.f32.gmra.mxu0 %v1285
        %v1308 = vpop.f32.mrf.mxu0
        %v1309 = vadd.f32 0.0, %v1308
        %1310 = vdwg.mxu0
        %1311 = vmatpush.msra.mxu0 0.0
        %1312 = vmatpush.msra.mxu0 0.0
        %1313 = vmatpush.msra.mxu0 0.0
        %1314 = vmatpush.msra.mxu0 0.0
        %1315 = vmatpush.msra.mxu0 0.0
        %1316 = vmatpush.msra.mxu0 0.0
        %1317 = vmatpush.msra.mxu0 0.0
        %1318 = vmatpush.msra.mxu0 0.0
        %1319 = vmatpush.msra.mxu0 0.0
        %1320 = vmatpush.msra.mxu0 0.0
        %1321 = vmatpush.msra.mxu0 0.0
        %1322 = vmatpush.msra.mxu0 0.0
        %1323 = vmatpush.msra.mxu0 0.0
        %1324 = vmatpush.msra.mxu0 0.0
        %1325 = vmatpush.msra.mxu0 0.0
        %1326 = vmatpush.msra.mxu0 %v1289
        %1327 = vmatmul.f32.gmra.mxu0 %v1285
        %v1328 = vpop.f32.mrf.mxu0
        %v1329 = vadd.f32 0.0, %v1328
        %1330 = vdwg.mxu0
        %1332 = vst [vmem:[#allocation1] ss:$2 sm:$0xff] %v1090
        %v1333 = vld.sshfl [vmem:[#allocation1] sm:$0xff pattern:$0x75316420]
        %v1334 = vld.sshfl [vmem:[#allocation1 + $0x8] sm:$0xff pattern:$0x75316420]
        %v1335 = vsel %vm489, %v871, 0
        %v1337 = vsel %vm493, %v1333, 0
        %v1339 = vsel %vm493, %v1334, 0
        %1341 = vmatpush.msra.mxu0 0.0
        %1342 = vmatpush.msra.mxu0 0.0
        %1343 = vmatpush.msra.mxu0 0.0
        %1344 = vmatpush.msra.mxu0 0.0
        %1345 = vmatpush.msra.mxu0 0.0
        %1346 = vmatpush.msra.mxu0 0.0
        %1347 = vmatpush.msra.mxu0 0.0
        %1348 = vmatpush.msra.mxu0 0.0
        %1349 = vmatpush.msra.mxu0 0.0
        %1350 = vmatpush.msra.mxu0 0.0
        %1351 = vmatpush.msra.mxu0 0.0
        %1352 = vmatpush.msra.mxu0 0.0
        %1353 = vmatpush.msra.mxu0 0.0
        %1354 = vmatpush.msra.mxu0 0.0
        %1355 = vmatpush.msra.mxu0 0.0
        %1356 = vmatpush.msra.mxu0 %v1337
        %1357 = vmatmul.f32.gmra.mxu0 %v1335
        %v1358 = vpop.f32.mrf.mxu0
        %v1359 = vadd.f32 %v1309, %v1358
        %1360 = vdwg.mxu0
        %1361 = vmatpush.msra.mxu0 0.0
        %1362 = vmatpush.msra.mxu0 0.0
        %1363 = vmatpush.msra.mxu0 0.0
        %1364 = vmatpush.msra.mxu0 0.0
        %1365 = vmatpush.msra.mxu0 0.0
        %1366 = vmatpush.msra.mxu0 0.0
        %1367 = vmatpush.msra.mxu0 0.0
        %1368 = vmatpush.msra.mxu0 0.0
        %1369 = vmatpush.msra.mxu0 0.0
        %1370 = vmatpush.msra.mxu0 0.0
        %1371 = vmatpush.msra.mxu0 0.0
        %1372 = vmatpush.msra.mxu0 0.0
        %1373 = vmatpush.msra.mxu0 0.0
        %1374 = vmatpush.msra.mxu0 0.0
        %1375 = vmatpush.msra.mxu0 0.0
        %1376 = vmatpush.msra.mxu0 %v1339
        %1377 = vmatmul.f32.gmra.mxu0 %v1335
        %v1378 = vpop.f32.mrf.mxu0
        %v1379 = vadd.f32 %v1329, %v1378
        %1380 = vdwg.mxu0
        %1381 = vmatpush.xpose.msra.mxu0 0.0
        %1382 = vmatpush.xpose.msra.mxu0 0.0
        %1383 = vmatpush.xpose.msra.mxu0 0.0
        %1384 = vmatpush.xpose.msra.mxu0 0.0
        %1385 = vmatpush.xpose.msra.mxu0 0.0
        %1386 = vmatpush.xpose.msra.mxu0 0.0
        %1387 = vmatpush.xpose.msra.mxu0 0.0
        %1388 = vmatpush.xpose.msra.mxu0 0.0
        %1389 = vmatpush.xpose.msra.mxu0 0.0
        %1390 = vmatpush.xpose.msra.mxu0 0.0
        %1391 = vmatpush.xpose.msra.mxu0 0.0
        %1392 = vmatpush.xpose.msra.mxu0 0.0
        %1393 = vmatpush.xpose.msra.mxu0 0.0
        %1394 = vmatpush.xpose.msra.mxu0 0.0
        %1395 = vmatpush.xpose.msra.mxu0 0.0
        %1396 = vmatpush.xpose.msra.mxu0 %v809
        %1397 = vmatmul.f32.gmra.mxu0 %v608
        %v1398 = vpop.f32.mrf.mxu0
        %v1399 = vadd.f32 0.0, %v1398
        %1400 = vdwg.mxu0
        %1401 = vmatpush.xpose.msra.mxu0 0.0
        %1402 = vmatpush.xpose.msra.mxu0 0.0
        %1403 = vmatpush.xpose.msra.mxu0 0.0
        %1404 = vmatpush.xpose.msra.mxu0 0.0
        %1405 = vmatpush.xpose.msra.mxu0 0.0
        %1406 = vmatpush.xpose.msra.mxu0 0.0
        %1407 = vmatpush.xpose.msra.mxu0 0.0
        %1408 = vmatpush.xpose.msra.mxu0 0.0
        %1409 = vmatpush.xpose.msra.mxu0 0.0
        %1410 = vmatpush.xpose.msra.mxu0 0.0
        %1411 = vmatpush.xpose.msra.mxu0 0.0
        %1412 = vmatpush.xpose.msra.mxu0 0.0
        %1413 = vmatpush.xpose.msra.mxu0 0.0
        %1414 = vmatpush.xpose.msra.mxu0 0.0
        %1415 = vmatpush.xpose.msra.mxu0 0.0
        %1416 = vmatpush.xpose.msra.mxu0 %v829
        %1417 = vmatmul.f32.gmra.mxu0 %v628
        %v1418 = vpop.f32.mrf.mxu0
        %v1419 = vadd.f32 %v1399, %v1418
        %1420 = vdwg.mxu0
        %v1422 = vsel %vm923, %v1419, 0
        %1424 = vmatpush.msra.mxu0 0.0
        %1425 = vmatpush.msra.mxu0 0.0
        %1426 = vmatpush.msra.mxu0 0.0
        %1427 = vmatpush.msra.mxu0 0.0
        %1428 = vmatpush.msra.mxu0 0.0
        %1429 = vmatpush.msra.mxu0 0.0
        %1430 = vmatpush.msra.mxu0 0.0
        %1431 = vmatpush.msra.mxu0 0.0
        %1432 = vmatpush.msra.mxu0 0.0
        %1433 = vmatpush.msra.mxu0 0.0
        %1434 = vmatpush.msra.mxu0 0.0
        %1435 = vmatpush.msra.mxu0 0.0
        %1436 = vmatpush.msra.mxu0 0.0
        %1437 = vmatpush.msra.mxu0 0.0
        %1438 = vmatpush.msra.mxu0 0.0
        %1439 = vmatpush.msra.mxu0 %v1422
        %1440 = vmatmul.f32.gmra.mxu0 %v921
        %v1441 = vpop.f32.mrf.mxu0
        %v1442 = vadd.f32 %v917, %v1441
        %1443 = vdwg.mxu0
        %v1445 = vsel %vm489, %v1442, 0
        %1447 = vmatpush.xpose.msra.mxu0 0.0
        %1448 = vmatpush.xpose.msra.mxu0 0.0
        %1449 = vmatpush.xpose.msra.mxu0 0.0
        %1450 = vmatpush.xpose.msra.mxu0 0.0
        %1451 = vmatpush.xpose.msra.mxu0 0.0
        %1452 = vmatpush.xpose.msra.mxu0 0.0
        %1453 = vmatpush.xpose.msra.mxu0 0.0
        %1454 = vmatpush.xpose.msra.mxu0 0.0
        %1455 = vmatpush.xpose.msra.mxu0 0.0
        %1456 = vmatpush.xpose.msra.mxu0 0.0
        %1457 = vmatpush.xpose.msra.mxu0 0.0
        %1458 = vmatpush.xpose.msra.mxu0 0.0
        %1459 = vmatpush.xpose.msra.mxu0 0.0
        %1460 = vmatpush.xpose.msra.mxu0 0.0
        %1461 = vmatpush.xpose.msra.mxu0 0.0
        %1462 = vmatpush.xpose.msra.mxu0 %v1445
        %1463 = vmatmul.f32.gmra.mxu0 %v955
        %v1464 = vpop.f32.mrf.mxu0
        %v1465 = vadd.f32 %v952, %v1464
        %1466 = vdwg.mxu0
        %v1468 = vsel %vm919, %v1465, 0
        %v1471 = vsel %vm923, %v608, 0
        %v1474 = vsel %vm923, %v628, 0
        %1476 = vmatpush.msra.mxu0 0.0
        %1477 = vmatpush.msra.mxu0 0.0
        %1478 = vmatpush.msra.mxu0 0.0
        %1479 = vmatpush.msra.mxu0 0.0
        %1480 = vmatpush.msra.mxu0 0.0
        %1481 = vmatpush.msra.mxu0 0.0
        %1482 = vmatpush.msra.mxu0 0.0
        %1483 = vmatpush.msra.mxu0 0.0
        %1484 = vmatpush.msra.mxu0 0.0
        %1485 = vmatpush.msra.mxu0 0.0
        %1486 = vmatpush.msra.mxu0 0.0
        %1487 = vmatpush.msra.mxu0 0.0
        %1488 = vmatpush.msra.mxu0 0.0
        %1489 = vmatpush.msra.mxu0 0.0
        %1490 = vmatpush.msra.mxu0 0.0
        %1491 = vmatpush.msra.mxu0 %v1471
        %1492 = vmatmul.f32.gmra.mxu0 %v1468
        %v1493 = vpop.f32.mrf.mxu0
        %v1494 = vadd.f32 0.0, %v1493
        %1495 = vdwg.mxu0
        %1496 = vmatpush.msra.mxu0 0.0
        %1497 = vmatpush.msra.mxu0 0.0
        %1498 = vmatpush.msra.mxu0 0.0
        %1499 = vmatpush.msra.mxu0 0.0
        %1500 = vmatpush.msra.mxu0 0.0
        %1501 = vmatpush.msra.mxu0 0.0
        %1502 = vmatpush.msra.mxu0 0.0
        %1503 = vmatpush.msra.mxu0 0.0
        %1504 = vmatpush.msra.mxu0 0.0
        %1505 = vmatpush.msra.mxu0 0.0
        %1506 = vmatpush.msra.mxu0 0.0
        %1507 = vmatpush.msra.mxu0 0.0
        %1508 = vmatpush.msra.mxu0 0.0
        %1509 = vmatpush.msra.mxu0 0.0
        %1510 = vmatpush.msra.mxu0 0.0
        %1511 = vmatpush.msra.mxu0 %v1474
        %1512 = vmatmul.f32.gmra.mxu0 %v1468
        %v1513 = vpop.f32.mrf.mxu0
        %v1514 = vadd.f32 0.0, %v1513
        %1515 = vdwg.mxu0
        %v1517 = vsel %vm493, %v1494, 0
        %v1520 = vsel %vm493, %v1514, 0
        %1522 = vmatpush.msra.mxu0 0.0
        %1523 = vmatpush.msra.mxu0 0.0
        %1524 = vmatpush.msra.mxu0 0.0
        %1525 = vmatpush.msra.mxu0 0.0
        %1526 = vmatpush.msra.mxu0 0.0
        %1527 = vmatpush.msra.mxu0 0.0
        %1528 = vmatpush.msra.mxu0 0.0
        %1529 = vmatpush.msra.mxu0 0.0
        %1530 = vmatpush.msra.mxu0 0.0
        %1531 = vmatpush.msra.mxu0 0.0
        %1532 = vmatpush.msra.mxu0 0.0
        %1533 = vmatpush.msra.mxu0 0.0
        %1534 = vmatpush.msra.mxu0 0.0
        %1535 = vmatpush.msra.mxu0 0.0
        %1536 = vmatpush.msra.mxu0 0.0
        %1537 = vmatpush.msra.mxu0 %v1517
        %1538 = vmatmul.f32.gmra.mxu0 %v1037
        %v1539 = vpop.f32.mrf.mxu0
        %v1540 = vadd.f32 %v1034, %v1539
        %1541 = vdwg.mxu0
        %1542 = vmatpush.msra.mxu0 0.0
        %1543 = vmatpush.msra.mxu0 0.0
        %1544 = vmatpush.msra.mxu0 0.0
        %1545 = vmatpush.msra.mxu0 0.0
        %1546 = vmatpush.msra.mxu0 0.0
        %1547 = vmatpush.msra.mxu0 0.0
        %1548 = vmatpush.msra.mxu0 0.0
        %1549 = vmatpush.msra.mxu0 0.0
        %1550 = vmatpush.msra.mxu0 0.0
        %1551 = vmatpush.msra.mxu0 0.0
        %1552 = vmatpush.msra.mxu0 0.0
        %1553 = vmatpush.msra.mxu0 0.0
        %1554 = vmatpush.msra.mxu0 0.0
        %1555 = vmatpush.msra.mxu0 0.0
        %1556 = vmatpush.msra.mxu0 0.0
        %1557 = vmatpush.msra.mxu0 %v1520
        %1558 = vmatmul.f32.gmra.mxu0 %v1037
        %v1559 = vpop.f32.mrf.mxu0
        %v1560 = vadd.f32 %v1034, %v1559
        %1561 = vdwg.mxu0
        %v1564 = vrot.slane %v1560, 4
        %v1565 = vsel %vm493, %v1540, %v1564
        %v1567 = vadd.f32 %v461, %v1565
        %1568 = vrot.lane.b32.xlu0 %v871, 120
        %v1569 = vpop.permute.xlu0 %1568
        %1571 = vst [vmem:[#allocation1] ss:$2 sm:$0xff] %v1567
        %v1572 = vld.sshfl [vmem:[#allocation1] sm:$0xff pattern:$0x75316420]
        %v1573 = vld.sshfl [vmem:[#allocation1 + $0x8] sm:$0xff pattern:$0x75316420]
        %v1574 = vsel %vm489, %v1569, 0
        %v1576 = vsel %vm493, %v1572, 0
        %v1578 = vsel %vm493, %v1573, 0
        %1580 = vmatpush.msra.mxu0 0.0
        %1581 = vmatpush.msra.mxu0 0.0
        %1582 = vmatpush.msra.mxu0 0.0
        %1583 = vmatpush.msra.mxu0 0.0
        %1584 = vmatpush.msra.mxu0 0.0
        %1585 = vmatpush.msra.mxu0 0.0
        %1586 = vmatpush.msra.mxu0 0.0
        %1587 = vmatpush.msra.mxu0 0.0
        %1588 = vmatpush.msra.mxu0 0.0
        %1589 = vmatpush.msra.mxu0 0.0
        %1590 = vmatpush.msra.mxu0 0.0
        %1591 = vmatpush.msra.mxu0 0.0
        %1592 = vmatpush.msra.mxu0 0.0
        %1593 = vmatpush.msra.mxu0 0.0
        %1594 = vmatpush.msra.mxu0 0.0
        %1595 = vmatpush.msra.mxu0 %v1576
        %1596 = vmatmul.f32.gmra.mxu0 %v1574
        %v1597 = vpop.f32.mrf.mxu0
        %v1598 = vadd.f32 0.0, %v1597
        %1599 = vdwg.mxu0
        %1600 = vmatpush.msra.mxu0 0.0
        %1601 = vmatpush.msra.mxu0 0.0
        %1602 = vmatpush.msra.mxu0 0.0
        %1603 = vmatpush.msra.mxu0 0.0
        %1604 = vmatpush.msra.mxu0 0.0
        %1605 = vmatpush.msra.mxu0 0.0
        %1606 = vmatpush.msra.mxu0 0.0
        %1607 = vmatpush.msra.mxu0 0.0
        %1608 = vmatpush.msra.mxu0 0.0
        %1609 = vmatpush.msra.mxu0 0.0
        %1610 = vmatpush.msra.mxu0 0.0
        %1611 = vmatpush.msra.mxu0 0.0
        %1612 = vmatpush.msra.mxu0 0.0
        %1613 = vmatpush.msra.mxu0 0.0
        %1614 = vmatpush.msra.mxu0 0.0
        %1615 = vmatpush.msra.mxu0 %v1578
        %1616 = vmatmul.f32.gmra.mxu0 %v1574
        %v1617 = vpop.f32.mrf.mxu0
        %v1618 = vadd.f32 0.0, %v1617
        %1619 = vdwg.mxu0
        %v1620 = vadd.f32 %v1359, %v1598
        %v1621 = vadd.f32 %v1379, %v1618
        %1622 = vmatpush.xpose.msra.mxu0 0.0
        %1623 = vmatpush.xpose.msra.mxu0 0.0
        %1624 = vmatpush.xpose.msra.mxu0 0.0
        %1625 = vmatpush.xpose.msra.mxu0 0.0
        %1626 = vmatpush.xpose.msra.mxu0 0.0
        %1627 = vmatpush.xpose.msra.mxu0 0.0
        %1628 = vmatpush.xpose.msra.mxu0 0.0
        %1629 = vmatpush.xpose.msra.mxu0 0.0
        %1630 = vmatpush.xpose.msra.mxu0 0.0
        %1631 = vmatpush.xpose.msra.mxu0 0.0
        %1632 = vmatpush.xpose.msra.mxu0 0.0
        %1633 = vmatpush.xpose.msra.mxu0 0.0
        %1634 = vmatpush.xpose.msra.mxu0 0.0
        %1635 = vmatpush.xpose.msra.mxu0 0.0
        %1636 = vmatpush.xpose.msra.mxu0 0.0
        %1637 = vmatpush.xpose.msra.mxu0 %v849
        %1638 = vmatmul.f32.gmra.mxu0 %v648
        %v1639 = vpop.f32.mrf.mxu0
        %v1640 = vadd.f32 0.0, %v1639
        %1641 = vdwg.mxu0
        %1642 = vmatpush.xpose.msra.mxu0 0.0
        %1643 = vmatpush.xpose.msra.mxu0 0.0
        %1644 = vmatpush.xpose.msra.mxu0 0.0
        %1645 = vmatpush.xpose.msra.mxu0 0.0
        %1646 = vmatpush.xpose.msra.mxu0 0.0
        %1647 = vmatpush.xpose.msra.mxu0 0.0
        %1648 = vmatpush.xpose.msra.mxu0 0.0
        %1649 = vmatpush.xpose.msra.mxu0 0.0
        %1650 = vmatpush.xpose.msra.mxu0 0.0
        %1651 = vmatpush.xpose.msra.mxu0 0.0
        %1652 = vmatpush.xpose.msra.mxu0 0.0
        %1653 = vmatpush.xpose.msra.mxu0 0.0
        %1654 = vmatpush.xpose.msra.mxu0 0.0
        %1655 = vmatpush.xpose.msra.mxu0 0.0
        %1656 = vmatpush.xpose.msra.mxu0 0.0
        %1657 = vmatpush.xpose.msra.mxu0 %v869
        %1658 = vmatmul.f32.gmra.mxu0 %v668
        %v1659 = vpop.f32.mrf.mxu0
        %v1660 = vadd.f32 %v1640, %v1659
        %1661 = vdwg.mxu0
        %v1663 = vsel %vm923, %v1660, 0
        %1665 = vmatpush.msra.mxu0 0.0
        %1666 = vmatpush.msra.mxu0 0.0
        %1667 = vmatpush.msra.mxu0 0.0
        %1668 = vmatpush.msra.mxu0 0.0
        %1669 = vmatpush.msra.mxu0 0.0
        %1670 = vmatpush.msra.mxu0 0.0
        %1671 = vmatpush.msra.mxu0 0.0
        %1672 = vmatpush.msra.mxu0 0.0
        %1673 = vmatpush.msra.mxu0 0.0
        %1674 = vmatpush.msra.mxu0 0.0
        %1675 = vmatpush.msra.mxu0 0.0
        %1676 = vmatpush.msra.mxu0 0.0
        %1677 = vmatpush.msra.mxu0 0.0
        %1678 = vmatpush.msra.mxu0 0.0
        %1679 = vmatpush.msra.mxu0 0.0
        %1680 = vmatpush.msra.mxu0 %v1663
        %1681 = vmatmul.f32.gmra.mxu0 %v921
        %v1682 = vpop.f32.mrf.mxu0
        %v1683 = vadd.f32 %v917, %v1682
        %1684 = vdwg.mxu0
        %v1686 = vsel %vm489, %v1683, 0
        %1688 = vmatpush.xpose.msra.mxu0 0.0
        %1689 = vmatpush.xpose.msra.mxu0 0.0
        %1690 = vmatpush.xpose.msra.mxu0 0.0
        %1691 = vmatpush.xpose.msra.mxu0 0.0
        %1692 = vmatpush.xpose.msra.mxu0 0.0
        %1693 = vmatpush.xpose.msra.mxu0 0.0
        %1694 = vmatpush.xpose.msra.mxu0 0.0
        %1695 = vmatpush.xpose.msra.mxu0 0.0
        %1696 = vmatpush.xpose.msra.mxu0 0.0
        %1697 = vmatpush.xpose.msra.mxu0 0.0
        %1698 = vmatpush.xpose.msra.mxu0 0.0
        %1699 = vmatpush.xpose.msra.mxu0 0.0
        %1700 = vmatpush.xpose.msra.mxu0 0.0
        %1701 = vmatpush.xpose.msra.mxu0 0.0
        %1702 = vmatpush.xpose.msra.mxu0 0.0
        %1703 = vmatpush.xpose.msra.mxu0 %v1686
        %1704 = vmatmul.f32.gmra.mxu0 %v955
        %v1705 = vpop.f32.mrf.mxu0
        %v1706 = vadd.f32 %v952, %v1705
        %1707 = vdwg.mxu0
        %v1709 = vsel %vm919, %v1706, 0
        %v1712 = vsel %vm923, %v648, 0
        %v1715 = vsel %vm923, %v668, 0
        %1717 = vmatpush.msra.mxu0 0.0
        %1718 = vmatpush.msra.mxu0 0.0
        %1719 = vmatpush.msra.mxu0 0.0
        %1720 = vmatpush.msra.mxu0 0.0
        %1721 = vmatpush.msra.mxu0 0.0
        %1722 = vmatpush.msra.mxu0 0.0
        %1723 = vmatpush.msra.mxu0 0.0
        %1724 = vmatpush.msra.mxu0 0.0
        %1725 = vmatpush.msra.mxu0 0.0
        %1726 = vmatpush.msra.mxu0 0.0
        %1727 = vmatpush.msra.mxu0 0.0
        %1728 = vmatpush.msra.mxu0 0.0
        %1729 = vmatpush.msra.mxu0 0.0
        %1730 = vmatpush.msra.mxu0 0.0
        %1731 = vmatpush.msra.mxu0 0.0
        %1732 = vmatpush.msra.mxu0 %v1712
        %1733 = vmatmul.f32.gmra.mxu0 %v1709
        %v1734 = vpop.f32.mrf.mxu0
        %v1735 = vadd.f32 0.0, %v1734
        %1736 = vdwg.mxu0
        %1737 = vmatpush.msra.mxu0 0.0
        %1738 = vmatpush.msra.mxu0 0.0
        %1739 = vmatpush.msra.mxu0 0.0
        %1740 = vmatpush.msra.mxu0 0.0
        %1741 = vmatpush.msra.mxu0 0.0
        %1742 = vmatpush.msra.mxu0 0.0
        %1743 = vmatpush.msra.mxu0 0.0
        %1744 = vmatpush.msra.mxu0 0.0
        %1745 = vmatpush.msra.mxu0 0.0
        %1746 = vmatpush.msra.mxu0 0.0
        %1747 = vmatpush.msra.mxu0 0.0
        %1748 = vmatpush.msra.mxu0 0.0
        %1749 = vmatpush.msra.mxu0 0.0
        %1750 = vmatpush.msra.mxu0 0.0
        %1751 = vmatpush.msra.mxu0 0.0
        %1752 = vmatpush.msra.mxu0 %v1715
        %1753 = vmatmul.f32.gmra.mxu0 %v1709
        %v1754 = vpop.f32.mrf.mxu0
        %v1755 = vadd.f32 0.0, %v1754
        %1756 = vdwg.mxu0
        %v1758 = vsel %vm493, %v1735, 0
        %v1761 = vsel %vm493, %v1755, 0
        %1763 = vmatpush.msra.mxu0 0.0
        %1764 = vmatpush.msra.mxu0 0.0
        %1765 = vmatpush.msra.mxu0 0.0
        %1766 = vmatpush.msra.mxu0 0.0
        %1767 = vmatpush.msra.mxu0 0.0
        %1768 = vmatpush.msra.mxu0 0.0
        %1769 = vmatpush.msra.mxu0 0.0
        %1770 = vmatpush.msra.mxu0 0.0
        %1771 = vmatpush.msra.mxu0 0.0
        %1772 = vmatpush.msra.mxu0 0.0
        %1773 = vmatpush.msra.mxu0 0.0
        %1774 = vmatpush.msra.mxu0 0.0
        %1775 = vmatpush.msra.mxu0 0.0
        %1776 = vmatpush.msra.mxu0 0.0
        %1777 = vmatpush.msra.mxu0 0.0
        %1778 = vmatpush.msra.mxu0 %v1758
        %1779 = vmatmul.f32.gmra.mxu0 %v1037
        %v1780 = vpop.f32.mrf.mxu0
        %v1781 = vadd.f32 %v1034, %v1780
        %1782 = vdwg.mxu0
        %1783 = vmatpush.msra.mxu0 0.0
        %1784 = vmatpush.msra.mxu0 0.0
        %1785 = vmatpush.msra.mxu0 0.0
        %1786 = vmatpush.msra.mxu0 0.0
        %1787 = vmatpush.msra.mxu0 0.0
        %1788 = vmatpush.msra.mxu0 0.0
        %1789 = vmatpush.msra.mxu0 0.0
        %1790 = vmatpush.msra.mxu0 0.0
        %1791 = vmatpush.msra.mxu0 0.0
        %1792 = vmatpush.msra.mxu0 0.0
        %1793 = vmatpush.msra.mxu0 0.0
        %1794 = vmatpush.msra.mxu0 0.0
        %1795 = vmatpush.msra.mxu0 0.0
        %1796 = vmatpush.msra.mxu0 0.0
        %1797 = vmatpush.msra.mxu0 0.0
        %1798 = vmatpush.msra.mxu0 %v1761
        %1799 = vmatmul.f32.gmra.mxu0 %v1037
        %v1800 = vpop.f32.mrf.mxu0
        %v1801 = vadd.f32 %v1034, %v1800
        %1802 = vdwg.mxu0
        %v1805 = vrot.slane %v1801, 4
        %v1806 = vsel %vm493, %v1781, %v1805
        %v1808 = vadd.f32 %v462, %v1806
        %1809 = vrot.lane.b32.xlu0 %v871, 116
        %v1810 = vpop.permute.xlu0 %1809
        %1812 = vst [vmem:[#allocation1] ss:$2 sm:$0xff] %v1808
        %v1813 = vld.sshfl [vmem:[#allocation1] sm:$0xff pattern:$0x75316420]
        %v1814 = vld.sshfl [vmem:[#allocation1 + $0x8] sm:$0xff pattern:$0x75316420]
        %v1815 = vsel %vm489, %v1810, 0
        %v1817 = vsel %vm493, %v1813, 0
        %v1819 = vsel %vm493, %v1814, 0
        %1821 = vmatpush.msra.mxu0 0.0
        %1822 = vmatpush.msra.mxu0 0.0
        %1823 = vmatpush.msra.mxu0 0.0
        %1824 = vmatpush.msra.mxu0 0.0
        %1825 = vmatpush.msra.mxu0 0.0
        %1826 = vmatpush.msra.mxu0 0.0
        %1827 = vmatpush.msra.mxu0 0.0
        %1828 = vmatpush.msra.mxu0 0.0
        %1829 = vmatpush.msra.mxu0 0.0
        %1830 = vmatpush.msra.mxu0 0.0
        %1831 = vmatpush.msra.mxu0 0.0
        %1832 = vmatpush.msra.mxu0 0.0
        %1833 = vmatpush.msra.mxu0 0.0
        %1834 = vmatpush.msra.mxu0 0.0
        %1835 = vmatpush.msra.mxu0 0.0
        %1836 = vmatpush.msra.mxu0 %v1817
        %1837 = vmatmul.f32.gmra.mxu0 %v1815
        %v1838 = vpop.f32.mrf.mxu0
        %v1839 = vadd.f32 0.0, %v1838
        %1840 = vdwg.mxu0
        %1841 = vmatpush.msra.mxu0 0.0
        %1842 = vmatpush.msra.mxu0 0.0
        %1843 = vmatpush.msra.mxu0 0.0
        %1844 = vmatpush.msra.mxu0 0.0
        %1845 = vmatpush.msra.mxu0 0.0
        %1846 = vmatpush.msra.mxu0 0.0
        %1847 = vmatpush.msra.mxu0 0.0
        %1848 = vmatpush.msra.mxu0 0.0
        %1849 = vmatpush.msra.mxu0 0.0
        %1850 = vmatpush.msra.mxu0 0.0
        %1851 = vmatpush.msra.mxu0 0.0
        %1852 = vmatpush.msra.mxu0 0.0
        %1853 = vmatpush.msra.mxu0 0.0
        %1854 = vmatpush.msra.mxu0 0.0
        %1855 = vmatpush.msra.mxu0 0.0
        %1856 = vmatpush.msra.mxu0 %v1819
        %1857 = vmatmul.f32.gmra.mxu0 %v1815
        %v1858 = vpop.f32.mrf.mxu0
        %v1859 = vadd.f32 0.0, %v1858
        %1860 = vdwg.mxu0
        %v1861 = vadd.f32 %v1620, %v1839
        %v1862 = vadd.f32 %v1621, %v1859
        %v1863 = vld [vmem:[%s12] sm:$0xf]
        %1865 = vset.pattern.permute.xlu0 0
        %1866 = vperm.xlu0 %1865, %v1863
        %v1867 = vpop.permute.xlu0 %1866
        %v1869 = vadd.f32 %v1861, %v1867
        %v1870 = vadd.f32 %v1862, %v1867
        %v1873 = vrot.slane %v1870, 4
        %v1874 = vsel %vm493, %v1869, %v1873
        %1876 = vst [vmem:[%s458] sm:$0xff] %v1874
        %s1877 = sand.u32 %s316, 1
        %s1878 = scalar_lea.sflag [#allocation4], %s1877
        %s1879 = sand.u32 %s316, 1
        %s1880 = smul.addr %s1879, 8
        %s1881 = scalar_lea.vmem [#allocation5], %s1880
        // Predicated region
        $region77: #{tpu_custom_call.1} parent=71 // pred_check
          %p1882 = pneg %p326
        $region78: #{tpu_custom_call.1} parent=71 // pred_check_branch
          %1884 = sbr.rel (%p1882) target = $region80
        $region79: #{tpu_custom_call.1} parent=71 // pred_region
          %1886 = vsyncadd %s1878, 0
          %s1887 = smul.addr %s30, 2
          %s1888 = smul.addr %s1887, 4
          %s1889 = scalar_lea.hbm %s13, %s1888
          %s1891 = sshll.u32 %s1881, 4
          %s1892 = int_to_ptr.vmem [resolvable:$true] %s1891
          %s1893 = sshll.u32 %s1889, 4
          %s1894 = int_to_ptr.hbm [resolvable:$true] %s1893
          %1896 = dma.vmem_to_hbm [thread:$0]  %s1892, 128, %s1894, %s1878
        $region80: #{tpu_custom_call.1} parent=71 // pred_fallthru
          _
      $region72: #{tpu_custom_call.1} parent=5 // pred_fallthru
        _
      %p1897 = scmp.le.s32.totalorder 2, %s25
      // Predicated region
      $region81: #{tpu_custom_call.1} parent=5 // pred_check
        %p1898 = pneg %p1897
      $region82: #{tpu_custom_call.1} parent=5 // pred_check_branch
        %1900 = sbr.rel (%p1898) target = $region84
      $region83: #{tpu_custom_call.1} parent=5 // pred_region
        %s1901 = ssub.s32 %s25, 2
        // Predicated region
        $region85: #{tpu_custom_call.1} parent=83 // pred_check
          %p1902 = pneg %p332
        $region86: #{tpu_custom_call.1} parent=83 // pred_check_branch
          %1904 = sbr.rel (%p1902) target = $region88
        $region87: #{tpu_custom_call.1} parent=83 // pred_region
          %s1905 = sand.u32 %s317, 1
          %s1906 = scalar_lea.sflag [#allocation4], %s1905
          %s1907 = sand.u32 %s317, 1
          %s1908 = smul.addr %s1907, 8
          %s1909 = scalar_lea.vmem [#allocation5], %s1908
          %1911 = dma.done %s1906, 128
        $region88: #{tpu_custom_call.1} parent=83 // pred_fallthru
          _
      $region84: #{tpu_custom_call.1} parent=5 // pred_fallthru
        _
    $region6: #{tpu_custom_call.1} parent=1 // loop_footer
      %s29 = sadd.s32 1, %s25
    $region7: #{tpu_custom_call.1} parent=1 // loop_footer_branch
      %24 = sbr.rel target = $region3
    $region8: #{tpu_custom_call.1} parent=1 // loop_exit
      _
    %1912 = vsyncpa [#allocation3], 1
    %s1913 = scalar_lea.sflag [#allocation3], 1
    %1914 = vsyncpa %s1913, 1
    %1915 = vsyncpa [#allocation4], 1
    %s1916 = scalar_lea.sflag [#allocation4], 1
    %1917 = vsyncpa %s1916, 1

</llo_original>
